<compile_context>
chip_gen: v7x
topology: tpu7x:2x2x1
jax: 0.10.0
libtpu: 0.0.40
codegen_flags: <defaults>
</compile_context>

<pallas_src>
import jax
import jax.numpy as jnp
import numpy as np
from jax.experimental import pallas as pl
from jax.experimental.pallas import tpu as pltpu


_DIMS = [512, 512, 256, 128, 64, 32, 16]       # fc1..fc6 in->out chain
_PAD_OUT = [512, 256, 128, 128, 128, 128]      # lane-padded out dim per layer
_PAD_IN = [512, 512, 256, 128, 128, 128]       # lane-padded in dim per layer
_LEAK = 0.01


def _leaky_relu_f32(z):
    return jnp.where(z > 0, z, _LEAK * z)


def mlp_kernel(x_ref,
               w1_ref, w2_ref, w3_ref, w4_ref, w5_ref, w6_ref,
               b_ref, o_ref):
    """x_ref: (TB, 512) f32; w*_ref: (in_pad, out_pad) bf16; b_ref: (8, 512) f32;
    o_ref: (TB, 128) f32 (lane-dense output slab, real outputs in [:, :16])."""
    h = x_ref[...].astype(jnp.float32)
    w_refs = (w1_ref, w2_ref, w3_ref, w4_ref, w5_ref, w6_ref)
    for layer, w_ref in enumerate(w_refs):
        out_pad = _PAD_OUT[layer]
        # bf16 x bf16 on the MXU, f32 accumulation.
        z = jnp.dot(h.astype(jnp.bfloat16), w_ref[...],
                    preferred_element_type=jnp.float32)
        z = z + b_ref[layer:layer + 1, :out_pad]   # bias add in f32 (v5e friendly)
        h = _leaky_relu_f32(z)                     # LeakyReLU in f32
    o_ref[...] = h.astype(o_ref.dtype)             # unmasked lane-dense store


def init_params(key, in_dim):
    """PyTorch-Linear-style uniform init; weights stored transposed (in, out), f32."""
    dims = [in_dim] + _DIMS[1:]
    params = []
    for i in range(6):
        fan_in, fan_out = dims[i], dims[i + 1]
        key, kw, kb = jax.random.split(key, 3)
        bound = 1.0 / float(np.sqrt(fan_in))
        w_t = jax.random.uniform(kw, (fan_in, fan_out), jnp.float32, -bound, bound)
        b = jax.random.uniform(kb, (fan_out,), jnp.float32, -bound, bound)
        params.append((w_t, b))
    return params


def pack_params(params, param_dtype=jnp.bfloat16):
    """Zero-pad weights to lane-dense (in_pad, out_pad) `param_dtype` matrices and
    pack the six biases into one (8, 512) f32 slab (row i = layer-i bias)."""
    ws = []
    b_slab = np.zeros((8, 512), np.float32)
    for i, (w_t, b) in enumerate(params):
        fan_in, fan_out = w_t.shape
        w_pad = jnp.zeros((_PAD_IN[i], _PAD_OUT[i]), jnp.float32)
        w_pad = w_pad.at[:fan_in, :fan_out].set(w_t)
        ws.append(w_pad.astype(param_dtype))
        b_slab[i, :fan_out] = np.asarray(b, np.float32)
    return tuple(ws) + (jnp.asarray(b_slab),)


def _round_up(x, m):
    return ((x + m - 1) // m) * m


def encoder_forward_batched(xb, packed):
    """xb: (B, 512) -> (B, 16) f32 encodings (per-row semantics == the PyTorch forward)."""
    w1, w2, w3, w4, w5, w6, b_slab = packed
    B = xb.shape[0]
    # At least 8 rows (f32 sublane); up to 256 rows per grid step (fits VMEM on
    # v5e/v6e/v7x with plenty of headroom: ~1 MB weights + ~0.5 MB activations).
    TB = 256 if B >= 256 else _round_up(max(B, 1), 8)
    B_pad = _round_up(B, TB)
    xb = xb.astype(jnp.float32)
    if B_pad != B:
        xb = jnp.pad(xb, ((0, B_pad - B), (0, 0)))

    grid = (B_pad // TB,)
    weight_specs = [pl.BlockSpec(w.shape, lambda i: (0, 0))
                    for w in (w1, w2, w3, w4, w5, w6)]
    in_specs = ([pl.BlockSpec((TB, 512), lambda i: (i, 0))]
                + weight_specs
                + [pl.BlockSpec(b_slab.shape, lambda i: (0, 0))])
    out_spec = pl.BlockSpec((TB, 128), lambda i: (i, 0))

    flops_per_row = 2 * (512 * 512 + 512 * 256 + 256 * 128 + 3 * 128 * 128)
    weight_bytes = sum(int(np.prod(w.shape)) * w.dtype.itemsize
                       for w in (w1, w2, w3, w4, w5, w6))
    cost = pl.CostEstimate(
        flops=B_pad * flops_per_row,
        transcendentals=0,
        bytes_accessed=weight_bytes + b_slab.size * 4
        + B_pad * 512 * 4 + B_pad * 128 * 4,
    )

    out = pl.pallas_call(
        mlp_kernel,
        out_shape=jax.ShapeDtypeStruct((B_pad, 128), jnp.float32),
        grid=grid,
        in_specs=in_specs,
        out_specs=out_spec,
        compiler_params=pltpu.CompilerParams(
            dimension_semantics=("parallel",)),
        cost_estimate=cost,
    )(xb, w1, w2, w3, w4, w5, w6, b_slab)

    return out[:B, :16]


def neural_net_forward(x, packed):
    """x: (size[0], size[1]); returns the (4, 4) encoding (original module semantics)."""
    x_row = x.reshape(1, -1)
    enc = encoder_forward_batched(x_row, packed)   # (1, 16)
    return enc.reshape(4, 4)


def _reference_batched(xb, packed):
    """Pure-JAX reference using the same bf16 weights (for a sanity check)."""
    w1, w2, w3, w4, w5, w6, b_slab = packed
    h = xb.astype(jnp.float32)
    for i, w in enumerate((w1, w2, w3, w4, w5, w6)):
        z = jnp.dot(h.astype(jnp.bfloat16), w, preferred_element_type=jnp.float32)
        z = z + b_slab[i:i + 1, :_PAD_OUT[i]]
        h = _leaky_relu_f32(z)
    return h[:, :16]


if __name__ == "__main__":
    # size = [16, 32] -> flattened input dim = 512 (matches fc1 in_features)
    size = (16, 32)
    key = jax.random.PRNGKey(0)
    key, kx, kb = jax.random.split(key, 3)

    params = init_params(jax.random.PRNGKey(0), size[0] * size[1])
    packed = pack_params(params)

    # Single-sample path: exactly the original module's forward (-> (4, 4)).
    x = jax.random.normal(kx, size, jnp.float32)
    encoded = jax.block_until_ready(neural_net_forward(x, packed))
    assert encoded.shape == (4, 4)

    # Small batched path (how the encoder is actually used when scoring data).
    xb = jax.random.normal(kb, (16, size[0] * size[1]), jnp.float32)
    enc_b = jax.block_until_ready(encoder_forward_batched(xb, packed))
    assert enc_b.shape == (16, 16)

    # Sanity check against a pure-JAX reference with the same bf16 weights.
    ref = jax.block_until_ready(_reference_batched(xb, packed))
    np.testing.assert_allclose(np.asarray(enc_b), np.asarray(ref),
                               rtol=1e-2, atol=1e-2)

    print("KERNEL_OK")
</pallas_src>

<mosaic_0001>
module attributes {stable_mosaic.version = 11 : i64} {
  func.func @mlp_kernel(%arg0: i32, %arg1: memref<8x512xf32, #tpu.memory_space<vmem>>, %arg2: memref<512x512xbf16, #tpu.memory_space<vmem>>, %arg3: memref<512x256xbf16, #tpu.memory_space<vmem>>, %arg4: memref<256x128xbf16, #tpu.memory_space<vmem>>, %arg5: memref<128x128xbf16, #tpu.memory_space<vmem>>, %arg6: memref<128x128xbf16, #tpu.memory_space<vmem>>, %arg7: memref<128x128xbf16, #tpu.memory_space<vmem>>, %arg8: memref<8x512xf32, #tpu.memory_space<vmem>>, %arg9: memref<8x128xf32, #tpu.memory_space<vmem>>) attributes {dimension_semantics = [#tpu.dimension_semantics<parallel>], iteration_bounds = array<i64: 1>, scalar_prefetch = 0 : i64, scratch_operands = 0 : i64, tpu.core_type = #tpu.core_type<tc>, window_params = [{transform_indices = @transform_0, window_bounds = array<i64: 8, 512>}, {pipeline_mode = #tpu.pipeline_mode<synchronous>, transform_indices = @transform_1, window_bounds = array<i64: 512, 512>}, {pipeline_mode = #tpu.pipeline_mode<synchronous>, transform_indices = @transform_2, window_bounds = array<i64: 512, 256>}, {pipeline_mode = #tpu.pipeline_mode<synchronous>, transform_indices = @transform_3, window_bounds = array<i64: 256, 128>}, {pipeline_mode = #tpu.pipeline_mode<synchronous>, transform_indices = @transform_4, window_bounds = array<i64: 128, 128>}, {pipeline_mode = #tpu.pipeline_mode<synchronous>, transform_indices = @transform_5, window_bounds = array<i64: 128, 128>}, {pipeline_mode = #tpu.pipeline_mode<synchronous>, transform_indices = @transform_6, window_bounds = array<i64: 128, 128>}, {pipeline_mode = #tpu.pipeline_mode<synchronous>, transform_indices = @transform_7, window_bounds = array<i64: 8, 512>}, {transform_indices = @transform_8, window_bounds = array<i64: 8, 128>}]} {
    %c0 = arith.constant 0 : index
    %c0_0 = arith.constant 0 : index
    %0 = vector.load %arg1[%c0, %c0_0] : memref<8x512xf32, #tpu.memory_space<vmem>>, vector<8x512xf32>
    %1 = arith.truncf %0 : vector<8x512xf32> to vector<8x512xbf16>
    %c0_1 = arith.constant 0 : index
    %c0_2 = arith.constant 0 : index
    %2 = vector.load %arg2[%c0_1, %c0_2] : memref<512x512xbf16, #tpu.memory_space<vmem>>, vector<512x512xbf16>
    %cst = arith.constant dense<0.000000e+00> : vector<8x512xf32>
    %3 = tpu.matmul %1, %2, %cst {dimension_numbers = #tpu.dot_dimension_numbers<[1], [0], [0], [1], [0, 0, 1, 1], [], []>} : vector<8x512xbf16>, vector<512x512xbf16>, vector<8x512xf32> -> vector<8x512xf32>
    %c0_3 = arith.constant 0 : index
    %c0_4 = arith.constant 0 : index
    %4 = vector.load %arg8[%c0_3, %c0_4] : memref<8x512xf32, #tpu.memory_space<vmem>>, vector<1x512xf32>
    %5 = vector.broadcast %4 : vector<1x512xf32> to vector<8x512xf32>
    %6 = arith.addf %3, %5 : vector<8x512xf32>
    %cst_5 = arith.constant 0.000000e+00 : f32
    %7 = vector.broadcast %cst_5 : f32 to vector<8x512xf32>
    %8 = arith.cmpf ogt, %6, %7 : vector<8x512xf32>
    %cst_6 = arith.constant 0.00999999977 : f32
    %9 = vector.broadcast %cst_6 : f32 to vector<8x512xf32>
    %10 = arith.mulf %9, %6 : vector<8x512xf32>
    %11 = arith.select %8, %6, %10 : vector<8x512xi1>, vector<8x512xf32>
    %12 = arith.truncf %11 : vector<8x512xf32> to vector<8x512xbf16>
    %c0_7 = arith.constant 0 : index
    %c0_8 = arith.constant 0 : index
    %13 = vector.load %arg3[%c0_7, %c0_8] : memref<512x256xbf16, #tpu.memory_space<vmem>>, vector<512x256xbf16>
    %cst_9 = arith.constant dense<0.000000e+00> : vector<8x256xf32>
    %14 = tpu.matmul %12, %13, %cst_9 {dimension_numbers = #tpu.dot_dimension_numbers<[1], [0], [0], [1], [0, 0, 1, 1], [], []>} : vector<8x512xbf16>, vector<512x256xbf16>, vector<8x256xf32> -> vector<8x256xf32>
    %c1 = arith.constant 1 : index
    %c0_10 = arith.constant 0 : index
    %15 = vector.load %arg8[%c1, %c0_10] : memref<8x512xf32, #tpu.memory_space<vmem>>, vector<1x256xf32>
    %16 = vector.broadcast %15 : vector<1x256xf32> to vector<8x256xf32>
    %17 = arith.addf %14, %16 : vector<8x256xf32>
    %cst_11 = arith.constant 0.000000e+00 : f32
    %18 = vector.broadcast %cst_11 : f32 to vector<8x256xf32>
    %19 = arith.cmpf ogt, %17, %18 : vector<8x256xf32>
    %cst_12 = arith.constant 0.00999999977 : f32
    %20 = vector.broadcast %cst_12 : f32 to vector<8x256xf32>
    %21 = arith.mulf %20, %17 : vector<8x256xf32>
    %22 = arith.select %19, %17, %21 : vector<8x256xi1>, vector<8x256xf32>
    %23 = arith.truncf %22 : vector<8x256xf32> to vector<8x256xbf16>
    %c0_13 = arith.constant 0 : index
    %c0_14 = arith.constant 0 : index
    %24 = vector.load %arg4[%c0_13, %c0_14] : memref<256x128xbf16, #tpu.memory_space<vmem>>, vector<256x128xbf16>
    %cst_15 = arith.constant dense<0.000000e+00> : vector<8x128xf32>
    %25 = tpu.matmul %23, %24, %cst_15 {dimension_numbers = #tpu.dot_dimension_numbers<[1], [0], [0], [1], [0, 0, 1, 1], [], []>} : vector<8x256xbf16>, vector<256x128xbf16>, vector<8x128xf32> -> vector<8x128xf32>
    %c2 = arith.constant 2 : index
    %c0_16 = arith.constant 0 : index
    %26 = vector.load %arg8[%c2, %c0_16] : memref<8x512xf32, #tpu.memory_space<vmem>>, vector<1x128xf32>
    %27 = vector.broadcast %26 : vector<1x128xf32> to vector<8x128xf32>
    %28 = arith.addf %25, %27 : vector<8x128xf32>
    %cst_17 = arith.constant 0.000000e+00 : f32
    %29 = vector.broadcast %cst_17 : f32 to vector<8x128xf32>
    %30 = arith.cmpf ogt, %28, %29 : vector<8x128xf32>
    %cst_18 = arith.constant 0.00999999977 : f32
    %31 = vector.broadcast %cst_18 : f32 to vector<8x128xf32>
    %32 = arith.mulf %31, %28 : vector<8x128xf32>
    %33 = arith.select %30, %28, %32 : vector<8x128xi1>, vector<8x128xf32>
    %34 = arith.truncf %33 : vector<8x128xf32> to vector<8x128xbf16>
    %c0_19 = arith.constant 0 : index
    %c0_20 = arith.constant 0 : index
    %35 = vector.load %arg5[%c0_19, %c0_20] : memref<128x128xbf16, #tpu.memory_space<vmem>>, vector<128x128xbf16>
    %cst_21 = arith.constant dense<0.000000e+00> : vector<8x128xf32>
    %36 = tpu.matmul %34, %35, %cst_21 {dimension_numbers = #tpu.dot_dimension_numbers<[1], [0], [0], [1], [0, 0, 1, 1], [], []>} : vector<8x128xbf16>, vector<128x128xbf16>, vector<8x128xf32> -> vector<8x128xf32>
    %c3 = arith.constant 3 : index
    %c0_22 = arith.constant 0 : index
    %37 = vector.load %arg8[%c3, %c0_22] : memref<8x512xf32, #tpu.memory_space<vmem>>, vector<1x128xf32>
    %38 = vector.broadcast %37 : vector<1x128xf32> to vector<8x128xf32>
    %39 = arith.addf %36, %38 : vector<8x128xf32>
    %cst_23 = arith.constant 0.000000e+00 : f32
    %40 = vector.broadcast %cst_23 : f32 to vector<8x128xf32>
    %41 = arith.cmpf ogt, %39, %40 : vector<8x128xf32>
    %cst_24 = arith.constant 0.00999999977 : f32
    %42 = vector.broadcast %cst_24 : f32 to vector<8x128xf32>
    %43 = arith.mulf %42, %39 : vector<8x128xf32>
    %44 = arith.select %41, %39, %43 : vector<8x128xi1>, vector<8x128xf32>
    %45 = arith.truncf %44 : vector<8x128xf32> to vector<8x128xbf16>
    %c0_25 = arith.constant 0 : index
    %c0_26 = arith.constant 0 : index
    %46 = vector.load %arg6[%c0_25, %c0_26] : memref<128x128xbf16, #tpu.memory_space<vmem>>, vector<128x128xbf16>
    %cst_27 = arith.constant dense<0.000000e+00> : vector<8x128xf32>
    %47 = tpu.matmul %45, %46, %cst_27 {dimension_numbers = #tpu.dot_dimension_numbers<[1], [0], [0], [1], [0, 0, 1, 1], [], []>} : vector<8x128xbf16>, vector<128x128xbf16>, vector<8x128xf32> -> vector<8x128xf32>
    %c4 = arith.constant 4 : index
    %c0_28 = arith.constant 0 : index
    %48 = vector.load %arg8[%c4, %c0_28] : memref<8x512xf32, #tpu.memory_space<vmem>>, vector<1x128xf32>
    %49 = vector.broadcast %48 : vector<1x128xf32> to vector<8x128xf32>
    %50 = arith.addf %47, %49 : vector<8x128xf32>
    %cst_29 = arith.constant 0.000000e+00 : f32
    %51 = vector.broadcast %cst_29 : f32 to vector<8x128xf32>
    %52 = arith.cmpf ogt, %50, %51 : vector<8x128xf32>
    %cst_30 = arith.constant 0.00999999977 : f32
    %53 = vector.broadcast %cst_30 : f32 to vector<8x128xf32>
    %54 = arith.mulf %53, %50 : vector<8x128xf32>
    %55 = arith.select %52, %50, %54 : vector<8x128xi1>, vector<8x128xf32>
    %56 = arith.truncf %55 : vector<8x128xf32> to vector<8x128xbf16>
    %c0_31 = arith.constant 0 : index
    %c0_32 = arith.constant 0 : index
    %57 = vector.load %arg7[%c0_31, %c0_32] : memref<128x128xbf16, #tpu.memory_space<vmem>>, vector<128x128xbf16>
    %cst_33 = arith.constant dense<0.000000e+00> : vector<8x128xf32>
    %58 = tpu.matmul %56, %57, %cst_33 {dimension_numbers = #tpu.dot_dimension_numbers<[1], [0], [0], [1], [0, 0, 1, 1], [], []>} : vector<8x128xbf16>, vector<128x128xbf16>, vector<8x128xf32> -> vector<8x128xf32>
    %c5 = arith.constant 5 : index
    %c0_34 = arith.constant 0 : index
    %59 = vector.load %arg8[%c5, %c0_34] : memref<8x512xf32, #tpu.memory_space<vmem>>, vector<1x128xf32>
    %60 = vector.broadcast %59 : vector<1x128xf32> to vector<8x128xf32>
    %61 = arith.addf %58, %60 : vector<8x128xf32>
    %cst_35 = arith.constant 0.000000e+00 : f32
    %62 = vector.broadcast %cst_35 : f32 to vector<8x128xf32>
    %63 = arith.cmpf ogt, %61, %62 : vector<8x128xf32>
    %cst_36 = arith.constant 0.00999999977 : f32
    %64 = vector.broadcast %cst_36 : f32 to vector<8x128xf32>
    %65 = arith.mulf %64, %61 : vector<8x128xf32>
    %66 = arith.select %63, %61, %65 : vector<8x128xi1>, vector<8x128xf32>
    %c0_37 = arith.constant 0 : index
    %c0_38 = arith.constant 0 : index
    %67 = vector.load %arg9[%c0_37, %c0_38] : memref<8x128xf32, #tpu.memory_space<vmem>>, vector<8x128xf32>
    tpu.vector_store %arg9[%c0_37, %c0_38], %66 {strides = array<i32>} : memref<8x128xf32, #tpu.memory_space<vmem>>, vector<8x128xf32>,
    return
  }
  func.func @transform_0(%arg0: i32) -> (i32, i32) {
    %c0_i32 = arith.constant 0 : i32
    %c0_i32_0 = arith.constant 0 : i32
    return %arg0, %c0_i32 : i32, i32
  }
  func.func @transform_1(%arg0: i32) -> (i32, i32) {
    %c0_i32 = arith.constant 0 : i32
    %c0_i32_0 = arith.constant 0 : i32
    %c0_i32_1 = arith.constant 0 : i32
    return %c0_i32, %c0_i32_0 : i32, i32
  }
  func.func @transform_2(%arg0: i32) -> (i32, i32) {
    %c0_i32 = arith.constant 0 : i32
    %c0_i32_0 = arith.constant 0 : i32
    %c0_i32_1 = arith.constant 0 : i32
    return %c0_i32, %c0_i32_0 : i32, i32
  }
  func.func @transform_3(%arg0: i32) -> (i32, i32) {
    %c0_i32 = arith.constant 0 : i32
    %c0_i32_0 = arith.constant 0 : i32
    %c0_i32_1 = arith.constant 0 : i32
    return %c0_i32, %c0_i32_0 : i32, i32
  }
  func.func @transform_4(%arg0: i32) -> (i32, i32) {
    %c0_i32 = arith.constant 0 : i32
    %c0_i32_0 = arith.constant 0 : i32
    %c0_i32_1 = arith.constant 0 : i32
    return %c0_i32, %c0_i32_0 : i32, i32
  }
  func.func @transform_5(%arg0: i32) -> (i32, i32) {
    %c0_i32 = arith.constant 0 : i32
    %c0_i32_0 = arith.constant 0 : i32
    %c0_i32_1 = arith.constant 0 : i32
    return %c0_i32, %c0_i32_0 : i32, i32
  }
  func.func @transform_6(%arg0: i32) -> (i32, i32) {
    %c0_i32 = arith.constant 0 : i32
    %c0_i32_0 = arith.constant 0 : i32
    %c0_i32_1 = arith.constant 0 : i32
    return %c0_i32, %c0_i32_0 : i32, i32
  }
  func.func @transform_7(%arg0: i32) -> (i32, i32) {
    %c0_i32 = arith.constant 0 : i32
    %c0_i32_0 = arith.constant 0 : i32
    %c0_i32_1 = arith.constant 0 : i32
    return %c0_i32, %c0_i32_0 : i32, i32
  }
  func.func @transform_8(%arg0: i32) -> (i32, i32) {
    %c0_i32 = arith.constant 0 : i32
    %c0_i32_0 = arith.constant 0 : i32
    return %arg0, %c0_i32 : i32, i32
  }
}

</mosaic_0001>

<llo_original>
// kernel: tpu_custom_call.1
$region0: #{tpu_custom_call.1}
  #allocation0 [shape = 'u32[]', space=smem, size = 0x4, offset = 0x4, fixed_abs, tag = 'smem constant byte address 0x4 - core index']
  #allocation1 [shape = 'u32[144,128]{1,0:T(1,128)}', space=vmem, size = 0x12000, scoped, tag = 'internal scratch']
  %s0 = inlined_call_operand.hbm [shape: f32[8,512], index: 0, kind: input, shape index: {}]
  %s1 = inlined_call_operand.hbm [shape: bf16[512,512], index: 1, kind: input, shape index: {}]
  %s2 = inlined_call_operand.hbm [shape: bf16[512,256], index: 2, kind: input, shape index: {}]
  %s3 = inlined_call_operand.hbm [shape: bf16[256,128], index: 3, kind: input, shape index: {}]
  %s4 = inlined_call_operand.hbm [shape: bf16[128,128], index: 4, kind: input, shape index: {}]
  %s5 = inlined_call_operand.hbm [shape: bf16[128,128], index: 5, kind: input, shape index: {}]
  %s6 = inlined_call_operand.hbm [shape: bf16[128,128], index: 6, kind: input, shape index: {}]
  %s7 = inlined_call_operand.hbm [shape: f32[8,512], index: 7, kind: input, shape index: {}]
  %s8 = inlined_call_operand.hbm [shape: f32[8,128], index: 8, kind: output, shape index: {}]
  %s9 = sld [smem:[#allocation0]]
  $region74: #{tpu_custom_call.1} parent=0
    _
  %s11 = ssub.s32 1, %s9
  %s12 = scalar_select 0, %s11, %s9
  $region1: #{tpu_custom_call.1} parent=0
    #allocation2 [shape = 'u8[16384]{0}', space=vmem, size = 0x4000, scoped, tag = 'input window, operand 0, single buffered']
    #allocation3 [shape = 's32[1]{0}', space=sflag, size = 0x4, scoped, tag = 'scoped memory for tpu_custom_call.1']
    #allocation4 [shape = 's32[1]{0}', space=sflag, size = 0x4, scoped, tag = 'scoped memory for tpu_custom_call.1']
    #allocation5 [shape = 'u8[524288]{0}', space=vmem, size = 0x80000, scoped, tag = 'input window, operand 1, single buffered']
    #allocation6 [shape = 's32[1]{0}', space=sflag, size = 0x4, scoped, tag = 'scoped memory for tpu_custom_call.1']
    #allocation7 [shape = 'u8[262144]{0}', space=vmem, size = 0x40000, scoped, tag = 'input window, operand 2, single buffered']
    #allocation8 [shape = 'u8[65536]{0}', space=vmem, size = 0x10000, scoped, tag = 'input window, operand 3, single buffered']
    #allocation9 [shape = 's32[1]{0}', space=sflag, size = 0x4, scoped, tag = 'scoped memory for tpu_custom_call.1']
    #allocation10 [shape = 'u8[32768]{0}', space=vmem, size = 0x8000, scoped, tag = 'input window, operand 4, single buffered']
    #allocation11 [shape = 'u8[32768]{0}', space=vmem, size = 0x8000, scoped, tag = 'input window, operand 5, single buffered']
    #allocation12 [shape = 's32[1]{0}', space=sflag, size = 0x4, scoped, tag = 'scoped memory for tpu_custom_call.1']
    #allocation13 [shape = 'u8[32768]{0}', space=vmem, size = 0x8000, scoped, tag = 'input window, operand 6, single buffered']
    #allocation14 [shape = 'u8[16384]{0}', space=vmem, size = 0x4000, scoped, tag = 'input window, operand 7, single buffered']
    #allocation15 [shape = 's32[1]{0}', space=sflag, size = 0x4, scoped, tag = 'scoped memory for tpu_custom_call.1']
    #allocation16 [shape = 'u8[4096]{0}', space=vmem, size = 0x1000, scoped, tag = 'output window, operand 0, single buffered']
    %13 = vsyncpa [#allocation3], 0
    %14 = vsyncpa [#allocation6], 0
    %15 = vsyncpa [#allocation9], 0
    %16 = vsyncpa [#allocation12], 0
    %17 = vsyncpa [#allocation15], 0
    %18 = vsyncpa [#allocation4], 0
    // Predicated region
    $region2: #{tpu_custom_call.1} parent=1 // pred_check
      _
    $region3: #{tpu_custom_call.1} parent=1 // pred_check_branch
      %20 = sbr.rel (0) target = $region5
    $region4: #{tpu_custom_call.1} parent=1 // pred_region
      %s22 = ssub.s32 512, 512
      %23 = vsyncadd [#allocation3], %s22
      %s25 = sshll.u32 [#allocation2], 4
      %s26 = int_to_ptr.vmem [resolvable:$true] %s25
      %28 = dma.hbm_to_vmem [thread:$0]  %s0, 512, %s26, [#allocation3]
    $region5: #{tpu_custom_call.1} parent=1 // pred_fallthru
      _
    // Predicated region
    $region6: #{tpu_custom_call.1} parent=1 // pred_check
      _
    $region7: #{tpu_custom_call.1} parent=1 // pred_check_branch
      %30 = sbr.rel (0) target = $region9
    $region8: #{tpu_custom_call.1} parent=1 // pred_region
      %s32 = ssub.s32 16384, 16384
      %33 = vsyncadd [#allocation6], %s32
      %s34 = sshll.u32 [#allocation5], 4
      %s35 = int_to_ptr.vmem [resolvable:$true] %s34
      %40 = dma.hbm_to_vmem [thread:$0]  %s1, 16384, %s35, [#allocation6], 256, 256, 16
    $region9: #{tpu_custom_call.1} parent=1 // pred_fallthru
      _
    // Predicated region
    $region10: #{tpu_custom_call.1} parent=1 // pred_check
      _
    $region11: #{tpu_custom_call.1} parent=1 // pred_check_branch
      %42 = sbr.rel (0) target = $region13
    $region12: #{tpu_custom_call.1} parent=1 // pred_region
      %s44 = ssub.s32 8192, 8192
      %45 = vsyncadd [#allocation6], %s44
      %s46 = sshll.u32 [#allocation7], 4
      %s47 = int_to_ptr.vmem [resolvable:$true] %s46
      %52 = dma.hbm_to_vmem [thread:$0]  %s2, 8192, %s47, [#allocation6], 128, 128, 8
    $region13: #{tpu_custom_call.1} parent=1 // pred_fallthru
      _
    // Predicated region
    $region14: #{tpu_custom_call.1} parent=1 // pred_check
      _
    $region15: #{tpu_custom_call.1} parent=1 // pred_check_branch
      %54 = sbr.rel (0) target = $region17
    $region16: #{tpu_custom_call.1} parent=1 // pred_region
      %s56 = ssub.s32 2048, 2048
      %57 = vsyncadd [#allocation9], %s56
      %s58 = sshll.u32 [#allocation8], 4
      %s59 = int_to_ptr.vmem [resolvable:$true] %s58
      %64 = dma.hbm_to_vmem [thread:$0]  %s3, 2048, %s59, [#allocation9], 64, 64, 4
    $region17: #{tpu_custom_call.1} parent=1 // pred_fallthru
      _
    // Predicated region
    $region18: #{tpu_custom_call.1} parent=1 // pred_check
      _
    $region19: #{tpu_custom_call.1} parent=1 // pred_check_branch
      %66 = sbr.rel (0) target = $region21
    $region20: #{tpu_custom_call.1} parent=1 // pred_region
      %s68 = ssub.s32 1024, 1024
      %69 = vsyncadd [#allocation9], %s68
      %s70 = sshll.u32 [#allocation10], 4
      %s71 = int_to_ptr.vmem [resolvable:$true] %s70
      %76 = dma.hbm_to_vmem [thread:$0]  %s4, 1024, %s71, [#allocation9], 64, 64, 4
    $region21: #{tpu_custom_call.1} parent=1 // pred_fallthru
      _
    // Predicated region
    $region22: #{tpu_custom_call.1} parent=1 // pred_check
      _
    $region23: #{tpu_custom_call.1} parent=1 // pred_check_branch
      %78 = sbr.rel (0) target = $region25
    $region24: #{tpu_custom_call.1} parent=1 // pred_region
      %s80 = ssub.s32 1024, 1024
      %81 = vsyncadd [#allocation12], %s80
      %s82 = sshll.u32 [#allocation11], 4
      %s83 = int_to_ptr.vmem [resolvable:$true] %s82
      %88 = dma.hbm_to_vmem [thread:$0]  %s5, 1024, %s83, [#allocation12], 64, 64, 4
    $region25: #{tpu_custom_call.1} parent=1 // pred_fallthru
      _
    // Predicated region
    $region26: #{tpu_custom_call.1} parent=1 // pred_check
      _
    $region27: #{tpu_custom_call.1} parent=1 // pred_check_branch
      %90 = sbr.rel (0) target = $region29
    $region28: #{tpu_custom_call.1} parent=1 // pred_region
      %s92 = ssub.s32 1024, 1024
      %93 = vsyncadd [#allocation12], %s92
      %s94 = sshll.u32 [#allocation13], 4
      %s95 = int_to_ptr.vmem [resolvable:$true] %s94
      %100 = dma.hbm_to_vmem [thread:$0]  %s6, 1024, %s95, [#allocation12], 64, 64, 4
    $region29: #{tpu_custom_call.1} parent=1 // pred_fallthru
      _
    // Predicated region
    $region30: #{tpu_custom_call.1} parent=1 // pred_check
      _
    $region31: #{tpu_custom_call.1} parent=1 // pred_check_branch
      %102 = sbr.rel (0) target = $region33
    $region32: #{tpu_custom_call.1} parent=1 // pred_region
      %s104 = ssub.s32 512, 512
      %105 = vsyncadd [#allocation15], %s104
      %s107 = sshll.u32 [#allocation14], 4
      %s108 = int_to_ptr.vmem [resolvable:$true] %s107
      %110 = dma.hbm_to_vmem [thread:$0]  %s7, 512, %s108, [#allocation15]
    $region33: #{tpu_custom_call.1} parent=1 // pred_fallthru
      _
    // Predicated region
    $region34: #{tpu_custom_call.1} parent=1 // pred_check
      _
    $region35: #{tpu_custom_call.1} parent=1 // pred_check_branch
      %112 = sbr.rel (0) target = $region37
    $region36: #{tpu_custom_call.1} parent=1 // pred_region
      %113 = dma.done [#allocation3], 512
    $region37: #{tpu_custom_call.1} parent=1 // pred_fallthru
      _
    // Predicated region
    $region38: #{tpu_custom_call.1} parent=1 // pred_check
      _
    $region39: #{tpu_custom_call.1} parent=1 // pred_check_branch
      %115 = sbr.rel (0) target = $region41
    $region40: #{tpu_custom_call.1} parent=1 // pred_region
      %116 = dma.done [#allocation6], 16384
    $region41: #{tpu_custom_call.1} parent=1 // pred_fallthru
      _
    // Predicated region
    $region42: #{tpu_custom_call.1} parent=1 // pred_check
      _
    $region43: #{tpu_custom_call.1} parent=1 // pred_check_branch
      %118 = sbr.rel (0) target = $region45
    $region44: #{tpu_custom_call.1} parent=1 // pred_region
      %119 = dma.done [#allocation6], 8192
    $region45: #{tpu_custom_call.1} parent=1 // pred_fallthru
      _
    // Predicated region
    $region46: #{tpu_custom_call.1} parent=1 // pred_check
      _
    $region47: #{tpu_custom_call.1} parent=1 // pred_check_branch
      %121 = sbr.rel (0) target = $region49
    $region48: #{tpu_custom_call.1} parent=1 // pred_region
      %122 = dma.done [#allocation9], 2048
    $region49: #{tpu_custom_call.1} parent=1 // pred_fallthru
      _
    // Predicated region
    $region50: #{tpu_custom_call.1} parent=1 // pred_check
      _
    $region51: #{tpu_custom_call.1} parent=1 // pred_check_branch
      %124 = sbr.rel (0) target = $region53
    $region52: #{tpu_custom_call.1} parent=1 // pred_region
      %125 = dma.done [#allocation9], 1024
    $region53: #{tpu_custom_call.1} parent=1 // pred_fallthru
      _
    // Predicated region
    $region54: #{tpu_custom_call.1} parent=1 // pred_check
      _
    $region55: #{tpu_custom_call.1} parent=1 // pred_check_branch
      %127 = sbr.rel (0) target = $region57
    $region56: #{tpu_custom_call.1} parent=1 // pred_region
      %128 = dma.done [#allocation12], 1024
    $region57: #{tpu_custom_call.1} parent=1 // pred_fallthru
      _
    // Predicated region
    $region58: #{tpu_custom_call.1} parent=1 // pred_check
      _
    $region59: #{tpu_custom_call.1} parent=1 // pred_check_branch
      %130 = sbr.rel (0) target = $region61
    $region60: #{tpu_custom_call.1} parent=1 // pred_region
      %131 = dma.done [#allocation12], 1024
    $region61: #{tpu_custom_call.1} parent=1 // pred_fallthru
      _
    // Predicated region
    $region62: #{tpu_custom_call.1} parent=1 // pred_check
      _
    $region63: #{tpu_custom_call.1} parent=1 // pred_check_branch
      %133 = sbr.rel (0) target = $region65
    $region64: #{tpu_custom_call.1} parent=1 // pred_region
      %134 = dma.done [#allocation15], 512
    $region65: #{tpu_custom_call.1} parent=1 // pred_fallthru
      _
    %v136 = vld [vmem:[#allocation2] sm:$0xff]
    %v137 = vld [vmem:[#allocation2 + $0x8] sm:$0xff]
    %v138 = vld [vmem:[#allocation2 + $0x10] sm:$0xff]
    %v139 = vld [vmem:[#allocation2 + $0x18] sm:$0xff]
    %v140 = vpack.c.bf16 %v136, %v136
    %v141 = vpack.c.bf16 %v137, %v137
    %v142 = vpack.c.bf16 %v138, %v138
    %v143 = vpack.c.bf16 %v139, %v139
    %v144 = vld [vmem:[#allocation5] sm:$0xff]
    %v145 = vld [vmem:[#allocation5 + $0x8] sm:$0xff]
    %v146 = vld [vmem:[#allocation5 + $0x10] sm:$0xff]
    %v147 = vld [vmem:[#allocation5 + $0x18] sm:$0xff]
    %v148 = vld [vmem:[#allocation5 + $0x20] sm:$0xff]
    %v149 = vld [vmem:[#allocation5 + $0x28] sm:$0xff]
    %v150 = vld [vmem:[#allocation5 + $0x30] sm:$0xff]
    %v151 = vld [vmem:[#allocation5 + $0x38] sm:$0xff]
    %v152 = vld [vmem:[#allocation5 + $0x40] sm:$0xff]
    %v153 = vld [vmem:[#allocation5 + $0x48] sm:$0xff]
    %v154 = vld [vmem:[#allocation5 + $0x50] sm:$0xff]
    %v155 = vld [vmem:[#allocation5 + $0x58] sm:$0xff]
    %v156 = vld [vmem:[#allocation5 + $0x60] sm:$0xff]
    %v157 = vld [vmem:[#allocation5 + $0x68] sm:$0xff]
    %v158 = vld [vmem:[#allocation5 + $0x70] sm:$0xff]
    %v159 = vld [vmem:[#allocation5 + $0x78] sm:$0xff]
    %v160 = vld [vmem:[#allocation5 + $0x80] sm:$0xff]
    %v161 = vld [vmem:[#allocation5 + $0x88] sm:$0xff]
    %v162 = vld [vmem:[#allocation5 + $0x90] sm:$0xff]
    %v163 = vld [vmem:[#allocation5 + $0x98] sm:$0xff]
    %v164 = vld [vmem:[#allocation5 + $0xa0] sm:$0xff]
    %v165 = vld [vmem:[#allocation5 + $0xa8] sm:$0xff]
    %v166 = vld [vmem:[#allocation5 + $0xb0] sm:$0xff]
    %v167 = vld [vmem:[#allocation5 + $0xb8] sm:$0xff]
    %v168 = vld [vmem:[#allocation5 + $0xc0] sm:$0xff]
    %v169 = vld [vmem:[#allocation5 + $0xc8] sm:$0xff]
    %v170 = vld [vmem:[#allocation5 + $0xd0] sm:$0xff]
    %v171 = vld [vmem:[#allocation5 + $0xd8] sm:$0xff]
    %v172 = vld [vmem:[#allocation5 + $0xe0] sm:$0xff]
    %v173 = vld [vmem:[#allocation5 + $0xe8] sm:$0xff]
    %v174 = vld [vmem:[#allocation5 + $0xf0] sm:$0xff]
    %v175 = vld [vmem:[#allocation5 + $0xf8] sm:$0xff]
    %v176 = vld [vmem:[#allocation5 + $0x100] sm:$0xff]
    %v177 = vld [vmem:[#allocation5 + $0x108] sm:$0xff]
    %v178 = vld [vmem:[#allocation5 + $0x110] sm:$0xff]
    %v179 = vld [vmem:[#allocation5 + $0x118] sm:$0xff]
    %v180 = vld [vmem:[#allocation5 + $0x120] sm:$0xff]
    %v181 = vld [vmem:[#allocation5 + $0x128] sm:$0xff]
    %v182 = vld [vmem:[#allocation5 + $0x130] sm:$0xff]
    %v183 = vld [vmem:[#allocation5 + $0x138] sm:$0xff]
    %v184 = vld [vmem:[#allocation5 + $0x140] sm:$0xff]
    %v185 = vld [vmem:[#allocation5 + $0x148] sm:$0xff]
    %v186 = vld [vmem:[#allocation5 + $0x150] sm:$0xff]
    %v187 = vld [vmem:[#allocation5 + $0x158] sm:$0xff]
    %v188 = vld [vmem:[#allocation5 + $0x160] sm:$0xff]
    %v189 = vld [vmem:[#allocation5 + $0x168] sm:$0xff]
    %v190 = vld [vmem:[#allocation5 + $0x170] sm:$0xff]
    %v191 = vld [vmem:[#allocation5 + $0x178] sm:$0xff]
    %v192 = vld [vmem:[#allocation5 + $0x180] sm:$0xff]
    %v193 = vld [vmem:[#allocation5 + $0x188] sm:$0xff]
    %v194 = vld [vmem:[#allocation5 + $0x190] sm:$0xff]
    %v195 = vld [vmem:[#allocation5 + $0x198] sm:$0xff]
    %v196 = vld [vmem:[#allocation5 + $0x1a0] sm:$0xff]
    %v197 = vld [vmem:[#allocation5 + $0x1a8] sm:$0xff]
    %v198 = vld [vmem:[#allocation5 + $0x1b0] sm:$0xff]
    %v199 = vld [vmem:[#allocation5 + $0x1b8] sm:$0xff]
    %v200 = vld [vmem:[#allocation5 + $0x1c0] sm:$0xff]
    %v201 = vld [vmem:[#allocation5 + $0x1c8] sm:$0xff]
    %v202 = vld [vmem:[#allocation5 + $0x1d0] sm:$0xff]
    %v203 = vld [vmem:[#allocation5 + $0x1d8] sm:$0xff]
    %v204 = vld [vmem:[#allocation5 + $0x1e0] sm:$0xff]
    %v205 = vld [vmem:[#allocation5 + $0x1e8] sm:$0xff]
    %v206 = vld [vmem:[#allocation5 + $0x1f0] sm:$0xff]
    %v207 = vld [vmem:[#allocation5 + $0x1f8] sm:$0xff]
    %v208 = vld [vmem:[#allocation5 + $0x200] sm:$0xff]
    %v209 = vld [vmem:[#allocation5 + $0x208] sm:$0xff]
    %v210 = vld [vmem:[#allocation5 + $0x210] sm:$0xff]
    %v211 = vld [vmem:[#allocation5 + $0x218] sm:$0xff]
    %v212 = vld [vmem:[#allocation5 + $0x220] sm:$0xff]
    %v213 = vld [vmem:[#allocation5 + $0x228] sm:$0xff]
    %v214 = vld [vmem:[#allocation5 + $0x230] sm:$0xff]
    %v215 = vld [vmem:[#allocation5 + $0x238] sm:$0xff]
    %v216 = vld [vmem:[#allocation5 + $0x240] sm:$0xff]
    %v217 = vld [vmem:[#allocation5 + $0x248] sm:$0xff]
    %v218 = vld [vmem:[#allocation5 + $0x250] sm:$0xff]
    %v219 = vld [vmem:[#allocation5 + $0x258] sm:$0xff]
    %v220 = vld [vmem:[#allocation5 + $0x260] sm:$0xff]
    %v221 = vld [vmem:[#allocation5 + $0x268] sm:$0xff]
    %v222 = vld [vmem:[#allocation5 + $0x270] sm:$0xff]
    %v223 = vld [vmem:[#allocation5 + $0x278] sm:$0xff]
    %v224 = vld [vmem:[#allocation5 + $0x280] sm:$0xff]
    %v225 = vld [vmem:[#allocation5 + $0x288] sm:$0xff]
    %v226 = vld [vmem:[#allocation5 + $0x290] sm:$0xff]
    %v227 = vld [vmem:[#allocation5 + $0x298] sm:$0xff]
    %v228 = vld [vmem:[#allocation5 + $0x2a0] sm:$0xff]
    %v229 = vld [vmem:[#allocation5 + $0x2a8] sm:$0xff]
    %v230 = vld [vmem:[#allocation5 + $0x2b0] sm:$0xff]
    %v231 = vld [vmem:[#allocation5 + $0x2b8] sm:$0xff]
    %v232 = vld [vmem:[#allocation5 + $0x2c0] sm:$0xff]
    %v233 = vld [vmem:[#allocation5 + $0x2c8] sm:$0xff]
    %v234 = vld [vmem:[#allocation5 + $0x2d0] sm:$0xff]
    %v235 = vld [vmem:[#allocation5 + $0x2d8] sm:$0xff]
    %v236 = vld [vmem:[#allocation5 + $0x2e0] sm:$0xff]
    %v237 = vld [vmem:[#allocation5 + $0x2e8] sm:$0xff]
    %v238 = vld [vmem:[#allocation5 + $0x2f0] sm:$0xff]
    %v239 = vld [vmem:[#allocation5 + $0x2f8] sm:$0xff]
    %v240 = vld [vmem:[#allocation5 + $0x300] sm:$0xff]
    %v241 = vld [vmem:[#allocation5 + $0x308] sm:$0xff]
    %v242 = vld [vmem:[#allocation5 + $0x310] sm:$0xff]
    %v243 = vld [vmem:[#allocation5 + $0x318] sm:$0xff]
    %v244 = vld [vmem:[#allocation5 + $0x320] sm:$0xff]
    %v245 = vld [vmem:[#allocation5 + $0x328] sm:$0xff]
    %v246 = vld [vmem:[#allocation5 + $0x330] sm:$0xff]
    %v247 = vld [vmem:[#allocation5 + $0x338] sm:$0xff]
    %v248 = vld [vmem:[#allocation5 + $0x340] sm:$0xff]
    %v249 = vld [vmem:[#allocation5 + $0x348] sm:$0xff]
    %v250 = vld [vmem:[#allocation5 + $0x350] sm:$0xff]
    %v251 = vld [vmem:[#allocation5 + $0x358] sm:$0xff]
    %v252 = vld [vmem:[#allocation5 + $0x360] sm:$0xff]
    %v253 = vld [vmem:[#allocation5 + $0x368] sm:$0xff]
    %v254 = vld [vmem:[#allocation5 + $0x370] sm:$0xff]
    %v255 = vld [vmem:[#allocation5 + $0x378] sm:$0xff]
    %v256 = vld [vmem:[#allocation5 + $0x380] sm:$0xff]
    %v257 = vld [vmem:[#allocation5 + $0x388] sm:$0xff]
    %v258 = vld [vmem:[#allocation5 + $0x390] sm:$0xff]
    %v259 = vld [vmem:[#allocation5 + $0x398] sm:$0xff]
    %v260 = vld [vmem:[#allocation5 + $0x3a0] sm:$0xff]
    %v261 = vld [vmem:[#allocation5 + $0x3a8] sm:$0xff]
    %v262 = vld [vmem:[#allocation5 + $0x3b0] sm:$0xff]
    %v263 = vld [vmem:[#allocation5 + $0x3b8] sm:$0xff]
    %v264 = vld [vmem:[#allocation5 + $0x3c0] sm:$0xff]
    %v265 = vld [vmem:[#allocation5 + $0x3c8] sm:$0xff]
    %v266 = vld [vmem:[#allocation5 + $0x3d0] sm:$0xff]
    %v267 = vld [vmem:[#allocation5 + $0x3d8] sm:$0xff]
    %v268 = vld [vmem:[#allocation5 + $0x3e0] sm:$0xff]
    %v269 = vld [vmem:[#allocation5 + $0x3e8] sm:$0xff]
    %v270 = vld [vmem:[#allocation5 + $0x3f0] sm:$0xff]
    %v271 = vld [vmem:[#allocation5 + $0x3f8] sm:$0xff]
    %v272 = vld [vmem:[#allocation14] ss:$8 sm:$0xf]
    %v274 = vlaneseq
    %v275 = vshrl.u32 %v274, 7
    %v276 = vsub.s32 0, %v275
    %v277 = vrot.slane %v272, %v276
    %v278 = vlaneseq
    %v279 = vshrl.u32 %v278, 7
    %v280 = vsub.s32 1, %v279
    %v281 = vrot.slane %v272, %v280
    %v282 = vlaneseq
    %v283 = vshrl.u32 %v282, 7
    %v284 = vsub.s32 2, %v283
    %v285 = vrot.slane %v272, %v284
    %v286 = vlaneseq
    %v287 = vshrl.u32 %v286, 7
    %v288 = vsub.s32 3, %v287
    %v289 = vrot.slane %v272, %v288
    %v422 = vunpack.c.l.b16 %v144
    %v423 = vunpack.c.h.b16 %v144
    %v424 = vunpack.c.l.b16 %v145
    %v425 = vunpack.c.h.b16 %v145
    %v426 = vunpack.c.l.b16 %v146
    %v427 = vunpack.c.h.b16 %v146
    %v428 = vunpack.c.l.b16 %v147
    %v429 = vunpack.c.h.b16 %v147
    %v430 = vunpack.c.l.b16 %v148
    %v431 = vunpack.c.h.b16 %v148
    %v432 = vunpack.c.l.b16 %v149
    %v433 = vunpack.c.h.b16 %v149
    %v434 = vunpack.c.l.b16 %v150
    %v435 = vunpack.c.h.b16 %v150
    %v436 = vunpack.c.l.b16 %v151
    %v437 = vunpack.c.h.b16 %v151
    %v438 = vunpack.c.l.b16 %v152
    %v439 = vunpack.c.h.b16 %v152
    %v440 = vunpack.c.l.b16 %v153
    %v441 = vunpack.c.h.b16 %v153
    %v442 = vunpack.c.l.b16 %v154
    %v443 = vunpack.c.h.b16 %v154
    %v444 = vunpack.c.l.b16 %v155
    %v445 = vunpack.c.h.b16 %v155
    %v446 = vunpack.c.l.b16 %v156
    %v447 = vunpack.c.h.b16 %v156
    %v448 = vunpack.c.l.b16 %v157
    %v449 = vunpack.c.h.b16 %v157
    %v450 = vunpack.c.l.b16 %v158
    %v451 = vunpack.c.h.b16 %v158
    %v452 = vunpack.c.l.b16 %v159
    %v453 = vunpack.c.h.b16 %v159
    %v454 = vunpack.c.l.b16 %v160
    %v455 = vunpack.c.h.b16 %v160
    %v456 = vunpack.c.l.b16 %v161
    %v457 = vunpack.c.h.b16 %v161
    %v458 = vunpack.c.l.b16 %v162
    %v459 = vunpack.c.h.b16 %v162
    %v460 = vunpack.c.l.b16 %v163
    %v461 = vunpack.c.h.b16 %v163
    %v462 = vunpack.c.l.b16 %v164
    %v463 = vunpack.c.h.b16 %v164
    %v464 = vunpack.c.l.b16 %v165
    %v465 = vunpack.c.h.b16 %v165
    %v466 = vunpack.c.l.b16 %v166
    %v467 = vunpack.c.h.b16 %v166
    %v468 = vunpack.c.l.b16 %v167
    %v469 = vunpack.c.h.b16 %v167
    %v470 = vunpack.c.l.b16 %v168
    %v471 = vunpack.c.h.b16 %v168
    %v472 = vunpack.c.l.b16 %v169
    %v473 = vunpack.c.h.b16 %v169
    %v474 = vunpack.c.l.b16 %v170
    %v475 = vunpack.c.h.b16 %v170
    %v476 = vunpack.c.l.b16 %v171
    %v477 = vunpack.c.h.b16 %v171
    %v478 = vunpack.c.l.b16 %v172
    %v479 = vunpack.c.h.b16 %v172
    %v480 = vunpack.c.l.b16 %v173
    %v481 = vunpack.c.h.b16 %v173
    %v482 = vunpack.c.l.b16 %v174
    %v483 = vunpack.c.h.b16 %v174
    %v484 = vunpack.c.l.b16 %v175
    %v485 = vunpack.c.h.b16 %v175
    %v486 = vunpack.c.l.b16 %v176
    %v487 = vunpack.c.h.b16 %v176
    %v488 = vunpack.c.l.b16 %v177
    %v489 = vunpack.c.h.b16 %v177
    %v490 = vunpack.c.l.b16 %v178
    %v491 = vunpack.c.h.b16 %v178
    %v492 = vunpack.c.l.b16 %v179
    %v493 = vunpack.c.h.b16 %v179
    %v494 = vunpack.c.l.b16 %v180
    %v495 = vunpack.c.h.b16 %v180
    %v496 = vunpack.c.l.b16 %v181
    %v497 = vunpack.c.h.b16 %v181
    %v498 = vunpack.c.l.b16 %v182
    %v499 = vunpack.c.h.b16 %v182
    %v500 = vunpack.c.l.b16 %v183
    %v501 = vunpack.c.h.b16 %v183
    %v502 = vunpack.c.l.b16 %v184
    %v503 = vunpack.c.h.b16 %v184
    %v504 = vunpack.c.l.b16 %v185
    %v505 = vunpack.c.h.b16 %v185
    %v506 = vunpack.c.l.b16 %v186
    %v507 = vunpack.c.h.b16 %v186
    %v508 = vunpack.c.l.b16 %v187
    %v509 = vunpack.c.h.b16 %v187
    %v510 = vunpack.c.l.b16 %v188
    %v511 = vunpack.c.h.b16 %v188
    %v512 = vunpack.c.l.b16 %v189
    %v513 = vunpack.c.h.b16 %v189
    %v514 = vunpack.c.l.b16 %v190
    %v515 = vunpack.c.h.b16 %v190
    %v516 = vunpack.c.l.b16 %v191
    %v517 = vunpack.c.h.b16 %v191
    %v518 = vunpack.c.l.b16 %v192
    %v519 = vunpack.c.h.b16 %v192
    %v520 = vunpack.c.l.b16 %v193
    %v521 = vunpack.c.h.b16 %v193
    %v522 = vunpack.c.l.b16 %v194
    %v523 = vunpack.c.h.b16 %v194
    %v524 = vunpack.c.l.b16 %v195
    %v525 = vunpack.c.h.b16 %v195
    %v526 = vunpack.c.l.b16 %v196
    %v527 = vunpack.c.h.b16 %v196
    %v528 = vunpack.c.l.b16 %v197
    %v529 = vunpack.c.h.b16 %v197
    %v530 = vunpack.c.l.b16 %v198
    %v531 = vunpack.c.h.b16 %v198
    %v532 = vunpack.c.l.b16 %v199
    %v533 = vunpack.c.h.b16 %v199
    %v534 = vunpack.c.l.b16 %v200
    %v535 = vunpack.c.h.b16 %v200
    %v536 = vunpack.c.l.b16 %v201
    %v537 = vunpack.c.h.b16 %v201
    %v538 = vunpack.c.l.b16 %v202
    %v539 = vunpack.c.h.b16 %v202
    %v540 = vunpack.c.l.b16 %v203
    %v541 = vunpack.c.h.b16 %v203
    %v542 = vunpack.c.l.b16 %v204
    %v543 = vunpack.c.h.b16 %v204
    %v544 = vunpack.c.l.b16 %v205
    %v545 = vunpack.c.h.b16 %v205
    %v546 = vunpack.c.l.b16 %v206
    %v547 = vunpack.c.h.b16 %v206
    %v548 = vunpack.c.l.b16 %v207
    %v549 = vunpack.c.h.b16 %v207
    %v550 = vunpack.c.l.b16 %v208
    %v551 = vunpack.c.h.b16 %v208
    %v552 = vunpack.c.l.b16 %v209
    %v553 = vunpack.c.h.b16 %v209
    %v554 = vunpack.c.l.b16 %v210
    %v555 = vunpack.c.h.b16 %v210
    %v556 = vunpack.c.l.b16 %v211
    %v557 = vunpack.c.h.b16 %v211
    %v558 = vunpack.c.l.b16 %v212
    %v559 = vunpack.c.h.b16 %v212
    %v560 = vunpack.c.l.b16 %v213
    %v561 = vunpack.c.h.b16 %v213
    %v562 = vunpack.c.l.b16 %v214
    %v563 = vunpack.c.h.b16 %v214
    %v564 = vunpack.c.l.b16 %v215
    %v565 = vunpack.c.h.b16 %v215
    %v566 = vunpack.c.l.b16 %v216
    %v567 = vunpack.c.h.b16 %v216
    %v568 = vunpack.c.l.b16 %v217
    %v569 = vunpack.c.h.b16 %v217
    %v570 = vunpack.c.l.b16 %v218
    %v571 = vunpack.c.h.b16 %v218
    %v572 = vunpack.c.l.b16 %v219
    %v573 = vunpack.c.h.b16 %v219
    %v574 = vunpack.c.l.b16 %v220
    %v575 = vunpack.c.h.b16 %v220
    %v576 = vunpack.c.l.b16 %v221
    %v577 = vunpack.c.h.b16 %v221
    %v578 = vunpack.c.l.b16 %v222
    %v579 = vunpack.c.h.b16 %v222
    %v580 = vunpack.c.l.b16 %v223
    %v581 = vunpack.c.h.b16 %v223
    %v582 = vunpack.c.l.b16 %v224
    %v583 = vunpack.c.h.b16 %v224
    %v584 = vunpack.c.l.b16 %v225
    %v585 = vunpack.c.h.b16 %v225
    %v586 = vunpack.c.l.b16 %v226
    %v587 = vunpack.c.h.b16 %v226
    %v588 = vunpack.c.l.b16 %v227
    %v589 = vunpack.c.h.b16 %v227
    %v590 = vunpack.c.l.b16 %v228
    %v591 = vunpack.c.h.b16 %v228
    %v592 = vunpack.c.l.b16 %v229
    %v593 = vunpack.c.h.b16 %v229
    %v594 = vunpack.c.l.b16 %v230
    %v595 = vunpack.c.h.b16 %v230
    %v596 = vunpack.c.l.b16 %v231
    %v597 = vunpack.c.h.b16 %v231
    %v598 = vunpack.c.l.b16 %v232
    %v599 = vunpack.c.h.b16 %v232
    %v600 = vunpack.c.l.b16 %v233
    %v601 = vunpack.c.h.b16 %v233
    %v602 = vunpack.c.l.b16 %v234
    %v603 = vunpack.c.h.b16 %v234
    %v604 = vunpack.c.l.b16 %v235
    %v605 = vunpack.c.h.b16 %v235
    %v606 = vunpack.c.l.b16 %v236
    %v607 = vunpack.c.h.b16 %v236
    %v608 = vunpack.c.l.b16 %v237
    %v609 = vunpack.c.h.b16 %v237
    %v610 = vunpack.c.l.b16 %v238
    %v611 = vunpack.c.h.b16 %v238
    %v612 = vunpack.c.l.b16 %v239
    %v613 = vunpack.c.h.b16 %v239
    %v614 = vunpack.c.l.b16 %v240
    %v615 = vunpack.c.h.b16 %v240
    %v616 = vunpack.c.l.b16 %v241
    %v617 = vunpack.c.h.b16 %v241
    %v618 = vunpack.c.l.b16 %v242
    %v619 = vunpack.c.h.b16 %v242
    %v620 = vunpack.c.l.b16 %v243
    %v621 = vunpack.c.h.b16 %v243
    %v622 = vunpack.c.l.b16 %v244
    %v623 = vunpack.c.h.b16 %v244
    %v624 = vunpack.c.l.b16 %v245
    %v625 = vunpack.c.h.b16 %v245
    %v626 = vunpack.c.l.b16 %v246
    %v627 = vunpack.c.h.b16 %v246
    %v628 = vunpack.c.l.b16 %v247
    %v629 = vunpack.c.h.b16 %v247
    %v630 = vunpack.c.l.b16 %v248
    %v631 = vunpack.c.h.b16 %v248
    %v632 = vunpack.c.l.b16 %v249
    %v633 = vunpack.c.h.b16 %v249
    %v634 = vunpack.c.l.b16 %v250
    %v635 = vunpack.c.h.b16 %v250
    %v636 = vunpack.c.l.b16 %v251
    %v637 = vunpack.c.h.b16 %v251
    %v638 = vunpack.c.l.b16 %v252
    %v639 = vunpack.c.h.b16 %v252
    %v640 = vunpack.c.l.b16 %v253
    %v641 = vunpack.c.h.b16 %v253
    %v642 = vunpack.c.l.b16 %v254
    %v643 = vunpack.c.h.b16 %v254
    %v644 = vunpack.c.l.b16 %v255
    %v645 = vunpack.c.h.b16 %v255
    %v646 = vunpack.c.l.b16 %v256
    %v647 = vunpack.c.h.b16 %v256
    %v648 = vunpack.c.l.b16 %v257
    %v649 = vunpack.c.h.b16 %v257
    %v650 = vunpack.c.l.b16 %v258
    %v651 = vunpack.c.h.b16 %v258
    %v652 = vunpack.c.l.b16 %v259
    %v653 = vunpack.c.h.b16 %v259
    %v654 = vunpack.c.l.b16 %v260
    %v655 = vunpack.c.h.b16 %v260
    %v656 = vunpack.c.l.b16 %v261
    %v657 = vunpack.c.h.b16 %v261
    %v658 = vunpack.c.l.b16 %v262
    %v659 = vunpack.c.h.b16 %v262
    %v660 = vunpack.c.l.b16 %v263
    %v661 = vunpack.c.h.b16 %v263
    %v662 = vunpack.c.l.b16 %v264
    %v663 = vunpack.c.h.b16 %v264
    %v664 = vunpack.c.l.b16 %v265
    %v665 = vunpack.c.h.b16 %v265
    %v666 = vunpack.c.l.b16 %v266
    %v667 = vunpack.c.h.b16 %v266
    %v668 = vunpack.c.l.b16 %v267
    %v669 = vunpack.c.h.b16 %v267
    %v670 = vunpack.c.l.b16 %v268
    %v671 = vunpack.c.h.b16 %v268
    %v672 = vunpack.c.l.b16 %v269
    %v673 = vunpack.c.h.b16 %v269
    %v674 = vunpack.c.l.b16 %v270
    %v675 = vunpack.c.h.b16 %v270
    %v676 = vunpack.c.l.b16 %v271
    %v677 = vunpack.c.h.b16 %v271
    %v678 = vpack.c.b16 %v426, %v422
    %v679 = vpack.c.b16 %v427, %v423
    %v680 = vpack.c.b16 %v428, %v424
    %v681 = vpack.c.b16 %v429, %v425
    %v682 = vpack.c.b16 %v434, %v430
    %v683 = vpack.c.b16 %v435, %v431
    %v684 = vpack.c.b16 %v436, %v432
    %v685 = vpack.c.b16 %v437, %v433
    %v686 = vpack.c.b16 %v442, %v438
    %v687 = vpack.c.b16 %v443, %v439
    %v688 = vpack.c.b16 %v444, %v440
    %v689 = vpack.c.b16 %v445, %v441
    %v690 = vpack.c.b16 %v450, %v446
    %v691 = vpack.c.b16 %v451, %v447
    %v692 = vpack.c.b16 %v452, %v448
    %v693 = vpack.c.b16 %v453, %v449
    %v694 = vpack.c.b16 %v458, %v454
    %v695 = vpack.c.b16 %v459, %v455
    %v696 = vpack.c.b16 %v460, %v456
    %v697 = vpack.c.b16 %v461, %v457
    %v698 = vpack.c.b16 %v466, %v462
    %v699 = vpack.c.b16 %v467, %v463
    %v700 = vpack.c.b16 %v468, %v464
    %v701 = vpack.c.b16 %v469, %v465
    %v702 = vpack.c.b16 %v474, %v470
    %v703 = vpack.c.b16 %v475, %v471
    %v704 = vpack.c.b16 %v476, %v472
    %v705 = vpack.c.b16 %v477, %v473
    %v706 = vpack.c.b16 %v482, %v478
    %v707 = vpack.c.b16 %v483, %v479
    %v708 = vpack.c.b16 %v484, %v480
    %v709 = vpack.c.b16 %v485, %v481
    %v710 = vpack.c.b16 %v490, %v486
    %v711 = vpack.c.b16 %v491, %v487
    %v712 = vpack.c.b16 %v492, %v488
    %v713 = vpack.c.b16 %v493, %v489
    %v714 = vpack.c.b16 %v498, %v494
    %v715 = vpack.c.b16 %v499, %v495
    %v716 = vpack.c.b16 %v500, %v496
    %v717 = vpack.c.b16 %v501, %v497
    %v718 = vpack.c.b16 %v506, %v502
    %v719 = vpack.c.b16 %v507, %v503
    %v720 = vpack.c.b16 %v508, %v504
    %v721 = vpack.c.b16 %v509, %v505
    %v722 = vpack.c.b16 %v514, %v510
    %v723 = vpack.c.b16 %v515, %v511
    %v724 = vpack.c.b16 %v516, %v512
    %v725 = vpack.c.b16 %v517, %v513
    %v726 = vpack.c.b16 %v522, %v518
    %v727 = vpack.c.b16 %v523, %v519
    %v728 = vpack.c.b16 %v524, %v520
    %v729 = vpack.c.b16 %v525, %v521
    %v730 = vpack.c.b16 %v530, %v526
    %v731 = vpack.c.b16 %v531, %v527
    %v732 = vpack.c.b16 %v532, %v528
    %v733 = vpack.c.b16 %v533, %v529
    %v734 = vpack.c.b16 %v538, %v534
    %v735 = vpack.c.b16 %v539, %v535
    %v736 = vpack.c.b16 %v540, %v536
    %v737 = vpack.c.b16 %v541, %v537
    %v738 = vpack.c.b16 %v546, %v542
    %v739 = vpack.c.b16 %v547, %v543
    %v740 = vpack.c.b16 %v548, %v544
    %v741 = vpack.c.b16 %v549, %v545
    %v742 = vpack.c.b16 %v554, %v550
    %v743 = vpack.c.b16 %v555, %v551
    %v744 = vpack.c.b16 %v556, %v552
    %v745 = vpack.c.b16 %v557, %v553
    %v746 = vpack.c.b16 %v562, %v558
    %v747 = vpack.c.b16 %v563, %v559
    %v748 = vpack.c.b16 %v564, %v560
    %v749 = vpack.c.b16 %v565, %v561
    %v750 = vpack.c.b16 %v570, %v566
    %v751 = vpack.c.b16 %v571, %v567
    %v752 = vpack.c.b16 %v572, %v568
    %v753 = vpack.c.b16 %v573, %v569
    %v754 = vpack.c.b16 %v578, %v574
    %v755 = vpack.c.b16 %v579, %v575
    %v756 = vpack.c.b16 %v580, %v576
    %v757 = vpack.c.b16 %v581, %v577
    %v758 = vpack.c.b16 %v586, %v582
    %v759 = vpack.c.b16 %v587, %v583
    %v760 = vpack.c.b16 %v588, %v584
    %v761 = vpack.c.b16 %v589, %v585
    %v762 = vpack.c.b16 %v594, %v590
    %v763 = vpack.c.b16 %v595, %v591
    %v764 = vpack.c.b16 %v596, %v592
    %v765 = vpack.c.b16 %v597, %v593
    %v766 = vpack.c.b16 %v602, %v598
    %v767 = vpack.c.b16 %v603, %v599
    %v768 = vpack.c.b16 %v604, %v600
    %v769 = vpack.c.b16 %v605, %v601
    %v770 = vpack.c.b16 %v610, %v606
    %v771 = vpack.c.b16 %v611, %v607
    %v772 = vpack.c.b16 %v612, %v608
    %v773 = vpack.c.b16 %v613, %v609
    %v774 = vpack.c.b16 %v618, %v614
    %v775 = vpack.c.b16 %v619, %v615
    %v776 = vpack.c.b16 %v620, %v616
    %v777 = vpack.c.b16 %v621, %v617
    %v778 = vpack.c.b16 %v626, %v622
    %v779 = vpack.c.b16 %v627, %v623
    %v780 = vpack.c.b16 %v628, %v624
    %v781 = vpack.c.b16 %v629, %v625
    %v782 = vpack.c.b16 %v634, %v630
    %v783 = vpack.c.b16 %v635, %v631
    %v784 = vpack.c.b16 %v636, %v632
    %v785 = vpack.c.b16 %v637, %v633
    %v786 = vpack.c.b16 %v642, %v638
    %v787 = vpack.c.b16 %v643, %v639
    %v788 = vpack.c.b16 %v644, %v640
    %v789 = vpack.c.b16 %v645, %v641
    %v790 = vpack.c.b16 %v650, %v646
    %v791 = vpack.c.b16 %v651, %v647
    %v792 = vpack.c.b16 %v652, %v648
    %v793 = vpack.c.b16 %v653, %v649
    %v794 = vpack.c.b16 %v658, %v654
    %v795 = vpack.c.b16 %v659, %v655
    %v796 = vpack.c.b16 %v660, %v656
    %v797 = vpack.c.b16 %v661, %v657
    %v798 = vpack.c.b16 %v666, %v662
    %v799 = vpack.c.b16 %v667, %v663
    %v800 = vpack.c.b16 %v668, %v664
    %v801 = vpack.c.b16 %v669, %v665
    %v802 = vpack.c.b16 %v674, %v670
    %v803 = vpack.c.b16 %v675, %v671
    %v804 = vpack.c.b16 %v676, %v672
    %v805 = vpack.c.b16 %v677, %v673
    %934 = vmatprep.subr.bf16.mxu0 %v679
    %935 = vmatpush1.bf16.msra.mxu0 %v678
    %936 = vmatprep.subr.bf16.mxu0 %v683
    %937 = vmatpush1.bf16.msra.mxu0 %v682
    %938 = vmatprep.subr.bf16.mxu0 %v687
    %939 = vmatpush1.bf16.msra.mxu0 %v686
    %940 = vmatprep.subr.bf16.mxu0 %v691
    %941 = vmatpush1.bf16.msra.mxu0 %v690
    %942 = vmatprep.subr.bf16.mxu0 %v695
    %943 = vmatpush1.bf16.msra.mxu0 %v694
    %944 = vmatprep.subr.bf16.mxu0 %v699
    %945 = vmatpush1.bf16.msra.mxu0 %v698
    %946 = vmatprep.subr.bf16.mxu0 %v703
    %947 = vmatpush1.bf16.msra.mxu0 %v702
    %948 = vmatprep.subr.bf16.mxu0 %v707
    %949 = vmatpush1.bf16.msra.mxu0 %v706
    %950 = vmatprep.subr.bf16.mxu0 %v711
    %951 = vmatpush1.bf16.msra.mxu0 %v710
    %952 = vmatprep.subr.bf16.mxu0 %v715
    %953 = vmatpush1.bf16.msra.mxu0 %v714
    %954 = vmatprep.subr.bf16.mxu0 %v719
    %955 = vmatpush1.bf16.msra.mxu0 %v718
    %956 = vmatprep.subr.bf16.mxu0 %v723
    %957 = vmatpush1.bf16.msra.mxu0 %v722
    %958 = vmatprep.subr.bf16.mxu0 %v727
    %959 = vmatpush1.bf16.msra.mxu0 %v726
    %960 = vmatprep.subr.bf16.mxu0 %v731
    %961 = vmatpush1.bf16.msra.mxu0 %v730
    %962 = vmatprep.subr.bf16.mxu0 %v735
    %963 = vmatpush1.bf16.msra.mxu0 %v734
    %964 = vmatprep.subr.bf16.mxu0 %v739
    %965 = vmatpush1.bf16.msra.mxu0 %v738
    %966 = vmatprep.mubr.bf16.mxu0 %v141
    %967 = vmatmul.mubr.bf16.gmra.mrb[0].mxu0 %v140
    %v968 = vpop.f32.mrb[0].mxu0
    %v969 = vadd.f32 %v277, %v968
    %v970 = vpop.f32.mrb[0].mxu0
    %v971 = vadd.f32 %v281, %v970
    %v972 = vpop.f32.mrb[0].mxu0
    %v973 = vpop.f32.mrb[0].mxu0
    %974 = vdwg.mxu0
    %975 = vmatprep.subr.bf16.mxu0 %v743
    %976 = vmatpush1.bf16.msra.mxu0 %v742
    %977 = vmatprep.subr.bf16.mxu0 %v747
    %978 = vmatpush1.bf16.msra.mxu0 %v746
    %979 = vmatprep.subr.bf16.mxu0 %v751
    %980 = vmatpush1.bf16.msra.mxu0 %v750
    %981 = vmatprep.subr.bf16.mxu0 %v755
    %982 = vmatpush1.bf16.msra.mxu0 %v754
    %983 = vmatprep.subr.bf16.mxu0 %v759
    %984 = vmatpush1.bf16.msra.mxu0 %v758
    %985 = vmatprep.subr.bf16.mxu0 %v763
    %986 = vmatpush1.bf16.msra.mxu0 %v762
    %987 = vmatprep.subr.bf16.mxu0 %v767
    %988 = vmatpush1.bf16.msra.mxu0 %v766
    %989 = vmatprep.subr.bf16.mxu0 %v771
    %990 = vmatpush1.bf16.msra.mxu0 %v770
    %991 = vmatprep.subr.bf16.mxu0 %v775
    %992 = vmatpush1.bf16.msra.mxu0 %v774
    %993 = vmatprep.subr.bf16.mxu0 %v779
    %994 = vmatpush1.bf16.msra.mxu0 %v778
    %995 = vmatprep.subr.bf16.mxu0 %v783
    %996 = vmatpush1.bf16.msra.mxu0 %v782
    %997 = vmatprep.subr.bf16.mxu0 %v787
    %998 = vmatpush1.bf16.msra.mxu0 %v786
    %999 = vmatprep.subr.bf16.mxu0 %v791
    %1000 = vmatpush1.bf16.msra.mxu0 %v790
    %1001 = vmatprep.subr.bf16.mxu0 %v795
    %1002 = vmatpush1.bf16.msra.mxu0 %v794
    %1003 = vmatprep.subr.bf16.mxu0 %v799
    %1004 = vmatpush1.bf16.msra.mxu0 %v798
    %1005 = vmatprep.subr.bf16.mxu0 %v803
    %1006 = vmatpush1.bf16.msra.mxu0 %v802
    %1007 = vmatprep.mubr.bf16.mxu0 %v143
    %1008 = vmatmul.mubr.bf16.gmra.mrb[0].mxu0 %v142
    %v1009 = vpop.f32.mrb[0].mxu0
    %v1010 = vadd.f32 %v969, %v1009
    %v1011 = vpop.f32.mrb[0].mxu0
    %v1012 = vadd.f32 %v971, %v1011
    %v1013 = vpop.f32.mrb[0].mxu0
    %v1014 = vpop.f32.mrb[0].mxu0
    %1015 = vdwg.mxu0
    %1016 = vmatprep.subr.bf16.mxu0 %v681
    %1017 = vmatpush1.bf16.msra.mxu0 %v680
    %1018 = vmatprep.subr.bf16.mxu0 %v685
    %1019 = vmatpush1.bf16.msra.mxu0 %v684
    %1020 = vmatprep.subr.bf16.mxu0 %v689
    %1021 = vmatpush1.bf16.msra.mxu0 %v688
    %1022 = vmatprep.subr.bf16.mxu0 %v693
    %1023 = vmatpush1.bf16.msra.mxu0 %v692
    %1024 = vmatprep.subr.bf16.mxu0 %v697
    %1025 = vmatpush1.bf16.msra.mxu0 %v696
    %1026 = vmatprep.subr.bf16.mxu0 %v701
    %1027 = vmatpush1.bf16.msra.mxu0 %v700
    %1028 = vmatprep.subr.bf16.mxu0 %v705
    %1029 = vmatpush1.bf16.msra.mxu0 %v704
    %1030 = vmatprep.subr.bf16.mxu0 %v709
    %1031 = vmatpush1.bf16.msra.mxu0 %v708
    %1032 = vmatprep.subr.bf16.mxu0 %v713
    %1033 = vmatpush1.bf16.msra.mxu0 %v712
    %1034 = vmatprep.subr.bf16.mxu0 %v717
    %1035 = vmatpush1.bf16.msra.mxu0 %v716
    %1036 = vmatprep.subr.bf16.mxu0 %v721
    %1037 = vmatpush1.bf16.msra.mxu0 %v720
    %1038 = vmatprep.subr.bf16.mxu0 %v725
    %1039 = vmatpush1.bf16.msra.mxu0 %v724
    %1040 = vmatprep.subr.bf16.mxu0 %v729
    %1041 = vmatpush1.bf16.msra.mxu0 %v728
    %1042 = vmatprep.subr.bf16.mxu0 %v733
    %1043 = vmatpush1.bf16.msra.mxu0 %v732
    %1044 = vmatprep.subr.bf16.mxu0 %v737
    %1045 = vmatpush1.bf16.msra.mxu0 %v736
    %1046 = vmatprep.subr.bf16.mxu0 %v741
    %1047 = vmatpush1.bf16.msra.mxu0 %v740
    %1048 = vmatprep.mubr.bf16.mxu0 %v141
    %1049 = vmatmul.mubr.bf16.gmra.mrb[0].mxu0 %v140
    %v1050 = vpop.f32.mrb[0].mxu0
    %v1051 = vadd.f32 %v285, %v1050
    %v1052 = vpop.f32.mrb[0].mxu0
    %v1053 = vadd.f32 %v289, %v1052
    %v1054 = vpop.f32.mrb[0].mxu0
    %v1055 = vpop.f32.mrb[0].mxu0
    %1056 = vdwg.mxu0
    %1057 = vmatprep.subr.bf16.mxu0 %v745
    %1058 = vmatpush1.bf16.msra.mxu0 %v744
    %1059 = vmatprep.subr.bf16.mxu0 %v749
    %1060 = vmatpush1.bf16.msra.mxu0 %v748
    %1061 = vmatprep.subr.bf16.mxu0 %v753
    %1062 = vmatpush1.bf16.msra.mxu0 %v752
    %1063 = vmatprep.subr.bf16.mxu0 %v757
    %1064 = vmatpush1.bf16.msra.mxu0 %v756
    %1065 = vmatprep.subr.bf16.mxu0 %v761
    %1066 = vmatpush1.bf16.msra.mxu0 %v760
    %1067 = vmatprep.subr.bf16.mxu0 %v765
    %1068 = vmatpush1.bf16.msra.mxu0 %v764
    %1069 = vmatprep.subr.bf16.mxu0 %v769
    %1070 = vmatpush1.bf16.msra.mxu0 %v768
    %1071 = vmatprep.subr.bf16.mxu0 %v773
    %1072 = vmatpush1.bf16.msra.mxu0 %v772
    %1073 = vmatprep.subr.bf16.mxu0 %v777
    %1074 = vmatpush1.bf16.msra.mxu0 %v776
    %1075 = vmatprep.subr.bf16.mxu0 %v781
    %1076 = vmatpush1.bf16.msra.mxu0 %v780
    %1077 = vmatprep.subr.bf16.mxu0 %v785
    %1078 = vmatpush1.bf16.msra.mxu0 %v784
    %1079 = vmatprep.subr.bf16.mxu0 %v789
    %1080 = vmatpush1.bf16.msra.mxu0 %v788
    %1081 = vmatprep.subr.bf16.mxu0 %v793
    %1082 = vmatpush1.bf16.msra.mxu0 %v792
    %1083 = vmatprep.subr.bf16.mxu0 %v797
    %1084 = vmatpush1.bf16.msra.mxu0 %v796
    %1085 = vmatprep.subr.bf16.mxu0 %v801
    %1086 = vmatpush1.bf16.msra.mxu0 %v800
    %1087 = vmatprep.subr.bf16.mxu0 %v805
    %1088 = vmatpush1.bf16.msra.mxu0 %v804
    %1089 = vmatprep.mubr.bf16.mxu0 %v143
    %1090 = vmatmul.mubr.bf16.gmra.mrb[0].mxu0 %v142
    %v1091 = vpop.f32.mrb[0].mxu0
    %v1092 = vadd.f32 %v1051, %v1091
    %v1093 = vpop.f32.mrb[0].mxu0
    %v1094 = vadd.f32 %v1053, %v1093
    %v1095 = vpop.f32.mrb[0].mxu0
    %v1096 = vpop.f32.mrb[0].mxu0
    %1097 = vdwg.mxu0
    %vm1098 = vcmp.gt.f32.partialorder %v1010, 0.0
    %vm1099 = vcmp.gt.f32.partialorder %v1012, 0.0
    %vm1100 = vcmp.gt.f32.partialorder %v1092, 0.0
    %vm1101 = vcmp.gt.f32.partialorder %v1094, 0.0
    %v1102 = vmul.f32 %v1010, 0.01
    %v1103 = vmul.f32 %v1012, 0.01
    %v1104 = vmul.f32 %v1092, 0.01
    %v1105 = vmul.f32 %v1094, 0.01
    %v1106 = vsel %vm1098, %v1010, %v1102
    %v1107 = vsel %vm1099, %v1012, %v1103
    %v1108 = vsel %vm1100, %v1092, %v1104
    %v1109 = vsel %vm1101, %v1094, %v1105
    %v1110 = vpack.c.bf16 %v1106, %v1106
    %v1111 = vpack.c.bf16 %v1107, %v1107
    %v1112 = vpack.c.bf16 %v1108, %v1108
    %v1113 = vpack.c.bf16 %v1109, %v1109
    %v1114 = vld [vmem:[#allocation7] sm:$0xff]
    %v1115 = vld [vmem:[#allocation7 + $0x8] sm:$0xff]
    %v1116 = vld [vmem:[#allocation7 + $0x10] sm:$0xff]
    %v1117 = vld [vmem:[#allocation7 + $0x18] sm:$0xff]
    %v1118 = vld [vmem:[#allocation7 + $0x20] sm:$0xff]
    %v1119 = vld [vmem:[#allocation7 + $0x28] sm:$0xff]
    %v1120 = vld [vmem:[#allocation7 + $0x30] sm:$0xff]
    %v1121 = vld [vmem:[#allocation7 + $0x38] sm:$0xff]
    %v1122 = vld [vmem:[#allocation7 + $0x40] sm:$0xff]
    %v1123 = vld [vmem:[#allocation7 + $0x48] sm:$0xff]
    %v1124 = vld [vmem:[#allocation7 + $0x50] sm:$0xff]
    %v1125 = vld [vmem:[#allocation7 + $0x58] sm:$0xff]
    %v1126 = vld [vmem:[#allocation7 + $0x60] sm:$0xff]
    %v1127 = vld [vmem:[#allocation7 + $0x68] sm:$0xff]
    %v1128 = vld [vmem:[#allocation7 + $0x70] sm:$0xff]
    %v1129 = vld [vmem:[#allocation7 + $0x78] sm:$0xff]
    %v1130 = vld [vmem:[#allocation7 + $0x80] sm:$0xff]
    %v1131 = vld [vmem:[#allocation7 + $0x88] sm:$0xff]
    %v1132 = vld [vmem:[#allocation7 + $0x90] sm:$0xff]
    %v1133 = vld [vmem:[#allocation7 + $0x98] sm:$0xff]
    %v1134 = vld [vmem:[#allocation7 + $0xa0] sm:$0xff]
    %v1135 = vld [vmem:[#allocation7 + $0xa8] sm:$0xff]
    %v1136 = vld [vmem:[#allocation7 + $0xb0] sm:$0xff]
    %v1137 = vld [vmem:[#allocation7 + $0xb8] sm:$0xff]
    %v1138 = vld [vmem:[#allocation7 + $0xc0] sm:$0xff]
    %v1139 = vld [vmem:[#allocation7 + $0xc8] sm:$0xff]
    %v1140 = vld [vmem:[#allocation7 + $0xd0] sm:$0xff]
    %v1141 = vld [vmem:[#allocation7 + $0xd8] sm:$0xff]
    %v1142 = vld [vmem:[#allocation7 + $0xe0] sm:$0xff]
    %v1143 = vld [vmem:[#allocation7 + $0xe8] sm:$0xff]
    %v1144 = vld [vmem:[#allocation7 + $0xf0] sm:$0xff]
    %v1145 = vld [vmem:[#allocation7 + $0xf8] sm:$0xff]
    %v1146 = vld [vmem:[#allocation7 + $0x100] sm:$0xff]
    %v1147 = vld [vmem:[#allocation7 + $0x108] sm:$0xff]
    %v1148 = vld [vmem:[#allocation7 + $0x110] sm:$0xff]
    %v1149 = vld [vmem:[#allocation7 + $0x118] sm:$0xff]
    %v1150 = vld [vmem:[#allocation7 + $0x120] sm:$0xff]
    %v1151 = vld [vmem:[#allocation7 + $0x128] sm:$0xff]
    %v1152 = vld [vmem:[#allocation7 + $0x130] sm:$0xff]
    %v1153 = vld [vmem:[#allocation7 + $0x138] sm:$0xff]
    %v1154 = vld [vmem:[#allocation7 + $0x140] sm:$0xff]
    %v1155 = vld [vmem:[#allocation7 + $0x148] sm:$0xff]
    %v1156 = vld [vmem:[#allocation7 + $0x150] sm:$0xff]
    %v1157 = vld [vmem:[#allocation7 + $0x158] sm:$0xff]
    %v1158 = vld [vmem:[#allocation7 + $0x160] sm:$0xff]
    %v1159 = vld [vmem:[#allocation7 + $0x168] sm:$0xff]
    %v1160 = vld [vmem:[#allocation7 + $0x170] sm:$0xff]
    %v1161 = vld [vmem:[#allocation7 + $0x178] sm:$0xff]
    %v1162 = vld [vmem:[#allocation7 + $0x180] sm:$0xff]
    %v1163 = vld [vmem:[#allocation7 + $0x188] sm:$0xff]
    %v1164 = vld [vmem:[#allocation7 + $0x190] sm:$0xff]
    %v1165 = vld [vmem:[#allocation7 + $0x198] sm:$0xff]
    %v1166 = vld [vmem:[#allocation7 + $0x1a0] sm:$0xff]
    %v1167 = vld [vmem:[#allocation7 + $0x1a8] sm:$0xff]
    %v1168 = vld [vmem:[#allocation7 + $0x1b0] sm:$0xff]
    %v1169 = vld [vmem:[#allocation7 + $0x1b8] sm:$0xff]
    %v1170 = vld [vmem:[#allocation7 + $0x1c0] sm:$0xff]
    %v1171 = vld [vmem:[#allocation7 + $0x1c8] sm:$0xff]
    %v1172 = vld [vmem:[#allocation7 + $0x1d0] sm:$0xff]
    %v1173 = vld [vmem:[#allocation7 + $0x1d8] sm:$0xff]
    %v1174 = vld [vmem:[#allocation7 + $0x1e0] sm:$0xff]
    %v1175 = vld [vmem:[#allocation7 + $0x1e8] sm:$0xff]
    %v1176 = vld [vmem:[#allocation7 + $0x1f0] sm:$0xff]
    %v1177 = vld [vmem:[#allocation7 + $0x1f8] sm:$0xff]
    %s1178 = scalar_lea.vmem [#allocation14], 1
    %v1179 = vld [vmem:[%s1178] ss:$8 sm:$0x3]
    %v1181 = vlaneseq
    %v1182 = vshrl.u32 %v1181, 7
    %v1183 = vsub.s32 0, %v1182
    %v1184 = vrot.slane %v1179, %v1183
    %v1185 = vlaneseq
    %v1186 = vshrl.u32 %v1185, 7
    %v1187 = vsub.s32 1, %v1186
    %v1188 = vrot.slane %v1179, %v1187
    %v1255 = vunpack.c.l.b16 %v1114
    %v1256 = vunpack.c.h.b16 %v1114
    %v1257 = vunpack.c.l.b16 %v1115
    %v1258 = vunpack.c.h.b16 %v1115
    %v1259 = vunpack.c.l.b16 %v1116
    %v1260 = vunpack.c.h.b16 %v1116
    %v1261 = vunpack.c.l.b16 %v1117
    %v1262 = vunpack.c.h.b16 %v1117
    %v1263 = vunpack.c.l.b16 %v1118
    %v1264 = vunpack.c.h.b16 %v1118
    %v1265 = vunpack.c.l.b16 %v1119
    %v1266 = vunpack.c.h.b16 %v1119
    %v1267 = vunpack.c.l.b16 %v1120
    %v1268 = vunpack.c.h.b16 %v1120
    %v1269 = vunpack.c.l.b16 %v1121
    %v1270 = vunpack.c.h.b16 %v1121
    %v1271 = vunpack.c.l.b16 %v1122
    %v1272 = vunpack.c.h.b16 %v1122
    %v1273 = vunpack.c.l.b16 %v1123
    %v1274 = vunpack.c.h.b16 %v1123
    %v1275 = vunpack.c.l.b16 %v1124
    %v1276 = vunpack.c.h.b16 %v1124
    %v1277 = vunpack.c.l.b16 %v1125
    %v1278 = vunpack.c.h.b16 %v1125
    %v1279 = vunpack.c.l.b16 %v1126
    %v1280 = vunpack.c.h.b16 %v1126
    %v1281 = vunpack.c.l.b16 %v1127
    %v1282 = vunpack.c.h.b16 %v1127
    %v1283 = vunpack.c.l.b16 %v1128
    %v1284 = vunpack.c.h.b16 %v1128
    %v1285 = vunpack.c.l.b16 %v1129
    %v1286 = vunpack.c.h.b16 %v1129
    %v1287 = vunpack.c.l.b16 %v1130
    %v1288 = vunpack.c.h.b16 %v1130
    %v1289 = vunpack.c.l.b16 %v1131
    %v1290 = vunpack.c.h.b16 %v1131
    %v1291 = vunpack.c.l.b16 %v1132
    %v1292 = vunpack.c.h.b16 %v1132
    %v1293 = vunpack.c.l.b16 %v1133
    %v1294 = vunpack.c.h.b16 %v1133
    %v1295 = vunpack.c.l.b16 %v1134
    %v1296 = vunpack.c.h.b16 %v1134
    %v1297 = vunpack.c.l.b16 %v1135
    %v1298 = vunpack.c.h.b16 %v1135
    %v1299 = vunpack.c.l.b16 %v1136
    %v1300 = vunpack.c.h.b16 %v1136
    %v1301 = vunpack.c.l.b16 %v1137
    %v1302 = vunpack.c.h.b16 %v1137
    %v1303 = vunpack.c.l.b16 %v1138
    %v1304 = vunpack.c.h.b16 %v1138
    %v1305 = vunpack.c.l.b16 %v1139
    %v1306 = vunpack.c.h.b16 %v1139
    %v1307 = vunpack.c.l.b16 %v1140
    %v1308 = vunpack.c.h.b16 %v1140
    %v1309 = vunpack.c.l.b16 %v1141
    %v1310 = vunpack.c.h.b16 %v1141
    %v1311 = vunpack.c.l.b16 %v1142
    %v1312 = vunpack.c.h.b16 %v1142
    %v1313 = vunpack.c.l.b16 %v1143
    %v1314 = vunpack.c.h.b16 %v1143
    %v1315 = vunpack.c.l.b16 %v1144
    %v1316 = vunpack.c.h.b16 %v1144
    %v1317 = vunpack.c.l.b16 %v1145
    %v1318 = vunpack.c.h.b16 %v1145
    %v1319 = vunpack.c.l.b16 %v1146
    %v1320 = vunpack.c.h.b16 %v1146
    %v1321 = vunpack.c.l.b16 %v1147
    %v1322 = vunpack.c.h.b16 %v1147
    %v1323 = vunpack.c.l.b16 %v1148
    %v1324 = vunpack.c.h.b16 %v1148
    %v1325 = vunpack.c.l.b16 %v1149
    %v1326 = vunpack.c.h.b16 %v1149
    %v1327 = vunpack.c.l.b16 %v1150
    %v1328 = vunpack.c.h.b16 %v1150
    %v1329 = vunpack.c.l.b16 %v1151
    %v1330 = vunpack.c.h.b16 %v1151
    %v1331 = vunpack.c.l.b16 %v1152
    %v1332 = vunpack.c.h.b16 %v1152
    %v1333 = vunpack.c.l.b16 %v1153
    %v1334 = vunpack.c.h.b16 %v1153
    %v1335 = vunpack.c.l.b16 %v1154
    %v1336 = vunpack.c.h.b16 %v1154
    %v1337 = vunpack.c.l.b16 %v1155
    %v1338 = vunpack.c.h.b16 %v1155
    %v1339 = vunpack.c.l.b16 %v1156
    %v1340 = vunpack.c.h.b16 %v1156
    %v1341 = vunpack.c.l.b16 %v1157
    %v1342 = vunpack.c.h.b16 %v1157
    %v1343 = vunpack.c.l.b16 %v1158
    %v1344 = vunpack.c.h.b16 %v1158
    %v1345 = vunpack.c.l.b16 %v1159
    %v1346 = vunpack.c.h.b16 %v1159
    %v1347 = vunpack.c.l.b16 %v1160
    %v1348 = vunpack.c.h.b16 %v1160
    %v1349 = vunpack.c.l.b16 %v1161
    %v1350 = vunpack.c.h.b16 %v1161
    %v1351 = vunpack.c.l.b16 %v1162
    %v1352 = vunpack.c.h.b16 %v1162
    %v1353 = vunpack.c.l.b16 %v1163
    %v1354 = vunpack.c.h.b16 %v1163
    %v1355 = vunpack.c.l.b16 %v1164
    %v1356 = vunpack.c.h.b16 %v1164
    %v1357 = vunpack.c.l.b16 %v1165
    %v1358 = vunpack.c.h.b16 %v1165
    %v1359 = vunpack.c.l.b16 %v1166
    %v1360 = vunpack.c.h.b16 %v1166
    %v1361 = vunpack.c.l.b16 %v1167
    %v1362 = vunpack.c.h.b16 %v1167
    %v1363 = vunpack.c.l.b16 %v1168
    %v1364 = vunpack.c.h.b16 %v1168
    %v1365 = vunpack.c.l.b16 %v1169
    %v1366 = vunpack.c.h.b16 %v1169
    %v1367 = vunpack.c.l.b16 %v1170
    %v1368 = vunpack.c.h.b16 %v1170
    %v1369 = vunpack.c.l.b16 %v1171
    %v1370 = vunpack.c.h.b16 %v1171
    %v1371 = vunpack.c.l.b16 %v1172
    %v1372 = vunpack.c.h.b16 %v1172
    %v1373 = vunpack.c.l.b16 %v1173
    %v1374 = vunpack.c.h.b16 %v1173
    %v1375 = vunpack.c.l.b16 %v1174
    %v1376 = vunpack.c.h.b16 %v1174
    %v1377 = vunpack.c.l.b16 %v1175
    %v1378 = vunpack.c.h.b16 %v1175
    %v1379 = vunpack.c.l.b16 %v1176
    %v1380 = vunpack.c.h.b16 %v1176
    %v1381 = vunpack.c.l.b16 %v1177
    %v1382 = vunpack.c.h.b16 %v1177
    %v1383 = vpack.c.b16 %v1257, %v1255
    %v1384 = vpack.c.b16 %v1258, %v1256
    %v1385 = vpack.c.b16 %v1261, %v1259
    %v1386 = vpack.c.b16 %v1262, %v1260
    %v1387 = vpack.c.b16 %v1265, %v1263
    %v1388 = vpack.c.b16 %v1266, %v1264
    %v1389 = vpack.c.b16 %v1269, %v1267
    %v1390 = vpack.c.b16 %v1270, %v1268
    %v1391 = vpack.c.b16 %v1273, %v1271
    %v1392 = vpack.c.b16 %v1274, %v1272
    %v1393 = vpack.c.b16 %v1277, %v1275
    %v1394 = vpack.c.b16 %v1278, %v1276
    %v1395 = vpack.c.b16 %v1281, %v1279
    %v1396 = vpack.c.b16 %v1282, %v1280
    %v1397 = vpack.c.b16 %v1285, %v1283
    %v1398 = vpack.c.b16 %v1286, %v1284
    %v1399 = vpack.c.b16 %v1289, %v1287
    %v1400 = vpack.c.b16 %v1290, %v1288
    %v1401 = vpack.c.b16 %v1293, %v1291
    %v1402 = vpack.c.b16 %v1294, %v1292
    %v1403 = vpack.c.b16 %v1297, %v1295
    %v1404 = vpack.c.b16 %v1298, %v1296
    %v1405 = vpack.c.b16 %v1301, %v1299
    %v1406 = vpack.c.b16 %v1302, %v1300
    %v1407 = vpack.c.b16 %v1305, %v1303
    %v1408 = vpack.c.b16 %v1306, %v1304
    %v1409 = vpack.c.b16 %v1309, %v1307
    %v1410 = vpack.c.b16 %v1310, %v1308
    %v1411 = vpack.c.b16 %v1313, %v1311
    %v1412 = vpack.c.b16 %v1314, %v1312
    %v1413 = vpack.c.b16 %v1317, %v1315
    %v1414 = vpack.c.b16 %v1318, %v1316
    %v1415 = vpack.c.b16 %v1321, %v1319
    %v1416 = vpack.c.b16 %v1322, %v1320
    %v1417 = vpack.c.b16 %v1325, %v1323
    %v1418 = vpack.c.b16 %v1326, %v1324
    %v1419 = vpack.c.b16 %v1329, %v1327
    %v1420 = vpack.c.b16 %v1330, %v1328
    %v1421 = vpack.c.b16 %v1333, %v1331
    %v1422 = vpack.c.b16 %v1334, %v1332
    %v1423 = vpack.c.b16 %v1337, %v1335
    %v1424 = vpack.c.b16 %v1338, %v1336
    %v1425 = vpack.c.b16 %v1341, %v1339
    %v1426 = vpack.c.b16 %v1342, %v1340
    %v1427 = vpack.c.b16 %v1345, %v1343
    %v1428 = vpack.c.b16 %v1346, %v1344
    %v1429 = vpack.c.b16 %v1349, %v1347
    %v1430 = vpack.c.b16 %v1350, %v1348
    %v1431 = vpack.c.b16 %v1353, %v1351
    %v1432 = vpack.c.b16 %v1354, %v1352
    %v1433 = vpack.c.b16 %v1357, %v1355
    %v1434 = vpack.c.b16 %v1358, %v1356
    %v1435 = vpack.c.b16 %v1361, %v1359
    %v1436 = vpack.c.b16 %v1362, %v1360
    %v1437 = vpack.c.b16 %v1365, %v1363
    %v1438 = vpack.c.b16 %v1366, %v1364
    %v1439 = vpack.c.b16 %v1369, %v1367
    %v1440 = vpack.c.b16 %v1370, %v1368
    %v1441 = vpack.c.b16 %v1373, %v1371
    %v1442 = vpack.c.b16 %v1374, %v1372
    %v1443 = vpack.c.b16 %v1377, %v1375
    %v1444 = vpack.c.b16 %v1378, %v1376
    %v1445 = vpack.c.b16 %v1381, %v1379
    %v1446 = vpack.c.b16 %v1382, %v1380
    %1511 = vmatprep.subr.bf16.mxu0 %v1384
    %1512 = vmatpush1.bf16.msra.mxu0 %v1383
    %1513 = vmatprep.subr.bf16.mxu0 %v1386
    %1514 = vmatpush1.bf16.msra.mxu0 %v1385
    %1515 = vmatprep.subr.bf16.mxu0 %v1388
    %1516 = vmatpush1.bf16.msra.mxu0 %v1387
    %1517 = vmatprep.subr.bf16.mxu0 %v1390
    %1518 = vmatpush1.bf16.msra.mxu0 %v1389
    %1519 = vmatprep.subr.bf16.mxu0 %v1392
    %1520 = vmatpush1.bf16.msra.mxu0 %v1391
    %1521 = vmatprep.subr.bf16.mxu0 %v1394
    %1522 = vmatpush1.bf16.msra.mxu0 %v1393
    %1523 = vmatprep.subr.bf16.mxu0 %v1396
    %1524 = vmatpush1.bf16.msra.mxu0 %v1395
    %1525 = vmatprep.subr.bf16.mxu0 %v1398
    %1526 = vmatpush1.bf16.msra.mxu0 %v1397
    %1527 = vmatprep.subr.bf16.mxu0 %v1400
    %1528 = vmatpush1.bf16.msra.mxu0 %v1399
    %1529 = vmatprep.subr.bf16.mxu0 %v1402
    %1530 = vmatpush1.bf16.msra.mxu0 %v1401
    %1531 = vmatprep.subr.bf16.mxu0 %v1404
    %1532 = vmatpush1.bf16.msra.mxu0 %v1403
    %1533 = vmatprep.subr.bf16.mxu0 %v1406
    %1534 = vmatpush1.bf16.msra.mxu0 %v1405
    %1535 = vmatprep.subr.bf16.mxu0 %v1408
    %1536 = vmatpush1.bf16.msra.mxu0 %v1407
    %1537 = vmatprep.subr.bf16.mxu0 %v1410
    %1538 = vmatpush1.bf16.msra.mxu0 %v1409
    %1539 = vmatprep.subr.bf16.mxu0 %v1412
    %1540 = vmatpush1.bf16.msra.mxu0 %v1411
    %1541 = vmatprep.subr.bf16.mxu0 %v1414
    %1542 = vmatpush1.bf16.msra.mxu0 %v1413
    %1543 = vmatprep.mubr.bf16.mxu0 %v1111
    %1544 = vmatmul.mubr.bf16.gmra.mrb[0].mxu0 %v1110
    %v1545 = vpop.f32.mrb[0].mxu0
    %v1546 = vadd.f32 %v1184, %v1545
    %v1547 = vpop.f32.mrb[0].mxu0
    %v1548 = vadd.f32 %v1188, %v1547
    %v1549 = vpop.f32.mrb[0].mxu0
    %v1550 = vpop.f32.mrb[0].mxu0
    %1551 = vdwg.mxu0
    %1552 = vmatprep.subr.bf16.mxu0 %v1416
    %1553 = vmatpush1.bf16.msra.mxu0 %v1415
    %1554 = vmatprep.subr.bf16.mxu0 %v1418
    %1555 = vmatpush1.bf16.msra.mxu0 %v1417
    %1556 = vmatprep.subr.bf16.mxu0 %v1420
    %1557 = vmatpush1.bf16.msra.mxu0 %v1419
    %1558 = vmatprep.subr.bf16.mxu0 %v1422
    %1559 = vmatpush1.bf16.msra.mxu0 %v1421
    %1560 = vmatprep.subr.bf16.mxu0 %v1424
    %1561 = vmatpush1.bf16.msra.mxu0 %v1423
    %1562 = vmatprep.subr.bf16.mxu0 %v1426
    %1563 = vmatpush1.bf16.msra.mxu0 %v1425
    %1564 = vmatprep.subr.bf16.mxu0 %v1428
    %1565 = vmatpush1.bf16.msra.mxu0 %v1427
    %1566 = vmatprep.subr.bf16.mxu0 %v1430
    %1567 = vmatpush1.bf16.msra.mxu0 %v1429
    %1568 = vmatprep.subr.bf16.mxu0 %v1432
    %1569 = vmatpush1.bf16.msra.mxu0 %v1431
    %1570 = vmatprep.subr.bf16.mxu0 %v1434
    %1571 = vmatpush1.bf16.msra.mxu0 %v1433
    %1572 = vmatprep.subr.bf16.mxu0 %v1436
    %1573 = vmatpush1.bf16.msra.mxu0 %v1435
    %1574 = vmatprep.subr.bf16.mxu0 %v1438
    %1575 = vmatpush1.bf16.msra.mxu0 %v1437
    %1576 = vmatprep.subr.bf16.mxu0 %v1440
    %1577 = vmatpush1.bf16.msra.mxu0 %v1439
    %1578 = vmatprep.subr.bf16.mxu0 %v1442
    %1579 = vmatpush1.bf16.msra.mxu0 %v1441
    %1580 = vmatprep.subr.bf16.mxu0 %v1444
    %1581 = vmatpush1.bf16.msra.mxu0 %v1443
    %1582 = vmatprep.subr.bf16.mxu0 %v1446
    %1583 = vmatpush1.bf16.msra.mxu0 %v1445
    %1584 = vmatprep.mubr.bf16.mxu0 %v1113
    %1585 = vmatmul.mubr.bf16.gmra.mrb[0].mxu0 %v1112
    %v1586 = vpop.f32.mrb[0].mxu0
    %v1587 = vadd.f32 %v1546, %v1586
    %v1588 = vpop.f32.mrb[0].mxu0
    %v1589 = vadd.f32 %v1548, %v1588
    %v1590 = vpop.f32.mrb[0].mxu0
    %v1591 = vpop.f32.mrb[0].mxu0
    %1592 = vdwg.mxu0
    %vm1593 = vcmp.gt.f32.partialorder %v1587, 0.0
    %vm1594 = vcmp.gt.f32.partialorder %v1589, 0.0
    %v1595 = vmul.f32 %v1587, 0.01
    %v1596 = vmul.f32 %v1589, 0.01
    %v1597 = vsel %vm1593, %v1587, %v1595
    %v1598 = vsel %vm1594, %v1589, %v1596
    %v1599 = vpack.c.bf16 %v1597, %v1597
    %v1600 = vpack.c.bf16 %v1598, %v1598
    %v1601 = vld [vmem:[#allocation8] sm:$0xf]
    %v1602 = vld [vmem:[#allocation8 + $0x4] sm:$0xf]
    %v1603 = vld [vmem:[#allocation8 + $0x8] sm:$0xf]
    %v1604 = vld [vmem:[#allocation8 + $0xc] sm:$0xf]
    %v1605 = vld [vmem:[#allocation8 + $0x10] sm:$0xf]
    %v1606 = vld [vmem:[#allocation8 + $0x14] sm:$0xf]
    %v1607 = vld [vmem:[#allocation8 + $0x18] sm:$0xf]
    %v1608 = vld [vmem:[#allocation8 + $0x1c] sm:$0xf]
    %v1609 = vld [vmem:[#allocation8 + $0x20] sm:$0xf]
    %v1610 = vld [vmem:[#allocation8 + $0x24] sm:$0xf]
    %v1611 = vld [vmem:[#allocation8 + $0x28] sm:$0xf]
    %v1612 = vld [vmem:[#allocation8 + $0x2c] sm:$0xf]
    %v1613 = vld [vmem:[#allocation8 + $0x30] sm:$0xf]
    %v1614 = vld [vmem:[#allocation8 + $0x34] sm:$0xf]
    %v1615 = vld [vmem:[#allocation8 + $0x38] sm:$0xf]
    %v1616 = vld [vmem:[#allocation8 + $0x3c] sm:$0xf]
    %v1617 = vld [vmem:[#allocation8 + $0x40] sm:$0xf]
    %v1618 = vld [vmem:[#allocation8 + $0x44] sm:$0xf]
    %v1619 = vld [vmem:[#allocation8 + $0x48] sm:$0xf]
    %v1620 = vld [vmem:[#allocation8 + $0x4c] sm:$0xf]
    %v1621 = vld [vmem:[#allocation8 + $0x50] sm:$0xf]
    %v1622 = vld [vmem:[#allocation8 + $0x54] sm:$0xf]
    %v1623 = vld [vmem:[#allocation8 + $0x58] sm:$0xf]
    %v1624 = vld [vmem:[#allocation8 + $0x5c] sm:$0xf]
    %v1625 = vld [vmem:[#allocation8 + $0x60] sm:$0xf]
    %v1626 = vld [vmem:[#allocation8 + $0x64] sm:$0xf]
    %v1627 = vld [vmem:[#allocation8 + $0x68] sm:$0xf]
    %v1628 = vld [vmem:[#allocation8 + $0x6c] sm:$0xf]
    %v1629 = vld [vmem:[#allocation8 + $0x70] sm:$0xf]
    %v1630 = vld [vmem:[#allocation8 + $0x74] sm:$0xf]
    %v1631 = vld [vmem:[#allocation8 + $0x78] sm:$0xf]
    %v1632 = vld [vmem:[#allocation8 + $0x7c] sm:$0xf]
    %v1633 = vld [vmem:[#allocation14 + $0x2] ss:$0 sm:$0xff]
    %v1666 = vunpack.c.l.b16 %v1601
    %v1667 = vunpack.c.l.b16 %v1602
    %v1668 = vunpack.c.l.b16 %v1603
    %v1669 = vunpack.c.l.b16 %v1604
    %v1670 = vunpack.c.l.b16 %v1605
    %v1671 = vunpack.c.l.b16 %v1606
    %v1672 = vunpack.c.l.b16 %v1607
    %v1673 = vunpack.c.l.b16 %v1608
    %v1674 = vunpack.c.l.b16 %v1609
    %v1675 = vunpack.c.l.b16 %v1610
    %v1676 = vunpack.c.l.b16 %v1611
    %v1677 = vunpack.c.l.b16 %v1612
    %v1678 = vunpack.c.l.b16 %v1613
    %v1679 = vunpack.c.l.b16 %v1614
    %v1680 = vunpack.c.l.b16 %v1615
    %v1681 = vunpack.c.l.b16 %v1616
    %v1682 = vunpack.c.l.b16 %v1617
    %v1683 = vunpack.c.l.b16 %v1618
    %v1684 = vunpack.c.l.b16 %v1619
    %v1685 = vunpack.c.l.b16 %v1620
    %v1686 = vunpack.c.l.b16 %v1621
    %v1687 = vunpack.c.l.b16 %v1622
    %v1688 = vunpack.c.l.b16 %v1623
    %v1689 = vunpack.c.l.b16 %v1624
    %v1690 = vunpack.c.l.b16 %v1625
    %v1691 = vunpack.c.l.b16 %v1626
    %v1692 = vunpack.c.l.b16 %v1627
    %v1693 = vunpack.c.l.b16 %v1628
    %v1694 = vunpack.c.l.b16 %v1629
    %v1695 = vunpack.c.l.b16 %v1630
    %v1696 = vunpack.c.l.b16 %v1631
    %v1697 = vunpack.c.l.b16 %v1632
    %v1698 = vpack.c.b16 %v1667, %v1666
    %v1699 = vpack.c.b16 %v1669, %v1668
    %v1700 = vpack.c.b16 %v1671, %v1670
    %v1701 = vpack.c.b16 %v1673, %v1672
    %v1702 = vpack.c.b16 %v1675, %v1674
    %v1703 = vpack.c.b16 %v1677, %v1676
    %v1704 = vpack.c.b16 %v1679, %v1678
    %v1705 = vpack.c.b16 %v1681, %v1680
    %v1706 = vpack.c.b16 %v1683, %v1682
    %v1707 = vpack.c.b16 %v1685, %v1684
    %v1708 = vpack.c.b16 %v1687, %v1686
    %v1709 = vpack.c.b16 %v1689, %v1688
    %v1710 = vpack.c.b16 %v1691, %v1690
    %v1711 = vpack.c.b16 %v1693, %v1692
    %v1712 = vpack.c.b16 %v1695, %v1694
    %v1713 = vpack.c.b16 %v1697, %v1696
    %1730 = vmatprep.subr.bf16.mxu0 0
    %1731 = vmatpush1.bf16.msra.mxu0 %v1698
    %1732 = vmatprep.subr.bf16.mxu0 0
    %1733 = vmatpush1.bf16.msra.mxu0 %v1699
    %1734 = vmatprep.subr.bf16.mxu0 0
    %1735 = vmatpush1.bf16.msra.mxu0 %v1700
    %1736 = vmatprep.subr.bf16.mxu0 0
    %1737 = vmatpush1.bf16.msra.mxu0 %v1701
    %1738 = vmatprep.subr.bf16.mxu0 0
    %1739 = vmatpush1.bf16.msra.mxu0 %v1702
    %1740 = vmatprep.subr.bf16.mxu0 0
    %1741 = vmatpush1.bf16.msra.mxu0 %v1703
    %1742 = vmatprep.subr.bf16.mxu0 0
    %1743 = vmatpush1.bf16.msra.mxu0 %v1704
    %1744 = vmatprep.subr.bf16.mxu0 0
    %1745 = vmatpush1.bf16.msra.mxu0 %v1705
    %1746 = vmatprep.subr.bf16.mxu0 0
    %1747 = vmatpush1.bf16.msra.mxu0 %v1706
    %1748 = vmatprep.subr.bf16.mxu0 0
    %1749 = vmatpush1.bf16.msra.mxu0 %v1707
    %1750 = vmatprep.subr.bf16.mxu0 0
    %1751 = vmatpush1.bf16.msra.mxu0 %v1708
    %1752 = vmatprep.subr.bf16.mxu0 0
    %1753 = vmatpush1.bf16.msra.mxu0 %v1709
    %1754 = vmatprep.subr.bf16.mxu0 0
    %1755 = vmatpush1.bf16.msra.mxu0 %v1710
    %1756 = vmatprep.subr.bf16.mxu0 0
    %1757 = vmatpush1.bf16.msra.mxu0 %v1711
    %1758 = vmatprep.subr.bf16.mxu0 0
    %1759 = vmatpush1.bf16.msra.mxu0 %v1712
    %1760 = vmatprep.subr.bf16.mxu0 0
    %1761 = vmatpush1.bf16.msra.mxu0 %v1713
    %1762 = vmatprep.mubr.bf16.mxu0 %v1600
    %1763 = vmatmul.mubr.bf16.gmra.mrb[0].mxu0 %v1599
    %v1764 = vpop.f32.mrb[0].mxu0
    %v1765 = vadd.f32 %v1633, %v1764
    %v1766 = vpop.f32.mrb[0].mxu0
    %v1767 = vpop.f32.mrb[0].mxu0
    %v1768 = vpop.f32.mrb[0].mxu0
    %1769 = vdwg.mxu0
    %vm1770 = vcmp.gt.f32.partialorder %v1765, 0.0
    %v1771 = vmul.f32 %v1765, 0.01
    %v1772 = vsel %vm1770, %v1765, %v1771
    %v1773 = vpack.c.bf16 %v1772, %v1772
    %v1774 = vld [vmem:[#allocation10] sm:$0xf]
    %v1775 = vld [vmem:[#allocation10 + $0x4] sm:$0xf]
    %v1776 = vld [vmem:[#allocation10 + $0x8] sm:$0xf]
    %v1777 = vld [vmem:[#allocation10 + $0xc] sm:$0xf]
    %v1778 = vld [vmem:[#allocation10 + $0x10] sm:$0xf]
    %v1779 = vld [vmem:[#allocation10 + $0x14] sm:$0xf]
    %v1780 = vld [vmem:[#allocation10 + $0x18] sm:$0xf]
    %v1781 = vld [vmem:[#allocation10 + $0x1c] sm:$0xf]
    %v1782 = vld [vmem:[#allocation10 + $0x20] sm:$0xf]
    %v1783 = vld [vmem:[#allocation10 + $0x24] sm:$0xf]
    %v1784 = vld [vmem:[#allocation10 + $0x28] sm:$0xf]
    %v1785 = vld [vmem:[#allocation10 + $0x2c] sm:$0xf]
    %v1786 = vld [vmem:[#allocation10 + $0x30] sm:$0xf]
    %v1787 = vld [vmem:[#allocation10 + $0x34] sm:$0xf]
    %v1788 = vld [vmem:[#allocation10 + $0x38] sm:$0xf]
    %v1789 = vld [vmem:[#allocation10 + $0x3c] sm:$0xf]
    %v1790 = vld [vmem:[#allocation14 + $0x3] ss:$0 sm:$0xff]
    %v1807 = vunpack.c.l.b16 %v1774
    %v1808 = vunpack.c.l.b16 %v1775
    %v1809 = vunpack.c.l.b16 %v1776
    %v1810 = vunpack.c.l.b16 %v1777
    %v1811 = vunpack.c.l.b16 %v1778
    %v1812 = vunpack.c.l.b16 %v1779
    %v1813 = vunpack.c.l.b16 %v1780
    %v1814 = vunpack.c.l.b16 %v1781
    %v1815 = vunpack.c.l.b16 %v1782
    %v1816 = vunpack.c.l.b16 %v1783
    %v1817 = vunpack.c.l.b16 %v1784
    %v1818 = vunpack.c.l.b16 %v1785
    %v1819 = vunpack.c.l.b16 %v1786
    %v1820 = vunpack.c.l.b16 %v1787
    %v1821 = vunpack.c.l.b16 %v1788
    %v1822 = vunpack.c.l.b16 %v1789
    %v1823 = vpack.c.b16 %v1808, %v1807
    %v1824 = vpack.c.b16 %v1810, %v1809
    %v1825 = vpack.c.b16 %v1812, %v1811
    %v1826 = vpack.c.b16 %v1814, %v1813
    %v1827 = vpack.c.b16 %v1816, %v1815
    %v1828 = vpack.c.b16 %v1818, %v1817
    %v1829 = vpack.c.b16 %v1820, %v1819
    %v1830 = vpack.c.b16 %v1822, %v1821
    %1839 = vmatprep.subr.bf16.mxu0 0
    %1840 = vmatpush1.bf16.msra.mxu0 %v1823
    %1841 = vmatprep.subr.bf16.mxu0 0
    %1842 = vmatpush1.bf16.msra.mxu0 %v1824
    %1843 = vmatprep.subr.bf16.mxu0 0
    %1844 = vmatpush1.bf16.msra.mxu0 %v1825
    %1845 = vmatprep.subr.bf16.mxu0 0
    %1846 = vmatpush1.bf16.msra.mxu0 %v1826
    %1847 = vmatprep.subr.bf16.mxu0 0
    %1848 = vmatpush1.bf16.msra.mxu0 %v1827
    %1849 = vmatprep.subr.bf16.mxu0 0
    %1850 = vmatpush1.bf16.msra.mxu0 %v1828
    %1851 = vmatprep.subr.bf16.mxu0 0
    %1852 = vmatpush1.bf16.msra.mxu0 %v1829
    %1853 = vmatprep.subr.bf16.mxu0 0
    %1854 = vmatpush1.bf16.msra.mxu0 %v1830
    %1855 = vmatprep.subr.bf16.mxu0 0
    %1856 = vmatpush1.bf16.msra.mxu0 0
    %1857 = vmatprep.subr.bf16.mxu0 0
    %1858 = vmatpush1.bf16.msra.mxu0 0
    %1859 = vmatprep.subr.bf16.mxu0 0
    %1860 = vmatpush1.bf16.msra.mxu0 0
    %1861 = vmatprep.subr.bf16.mxu0 0
    %1862 = vmatpush1.bf16.msra.mxu0 0
    %1863 = vmatprep.subr.bf16.mxu0 0
    %1864 = vmatpush1.bf16.msra.mxu0 0
    %1865 = vmatprep.subr.bf16.mxu0 0
    %1866 = vmatpush1.bf16.msra.mxu0 0
    %1867 = vmatprep.subr.bf16.mxu0 0
    %1868 = vmatpush1.bf16.msra.mxu0 0
    %1869 = vmatprep.subr.bf16.mxu0 0
    %1870 = vmatpush1.bf16.msra.mxu0 0
    %1871 = vmatprep.mubr.bf16.mxu0 0
    %1872 = vmatmul.mubr.bf16.gmra.mrb[0].mxu0 %v1773
    %v1873 = vpop.f32.mrb[0].mxu0
    %v1874 = vadd.f32 %v1790, %v1873
    %v1875 = vpop.f32.mrb[0].mxu0
    %v1876 = vpop.f32.mrb[0].mxu0
    %v1877 = vpop.f32.mrb[0].mxu0
    %1878 = vdwg.mxu0
    %vm1879 = vcmp.gt.f32.partialorder %v1874, 0.0
    %v1880 = vmul.f32 %v1874, 0.01
    %v1881 = vsel %vm1879, %v1874, %v1880
    %v1882 = vpack.c.bf16 %v1881, %v1881
    %v1883 = vld [vmem:[#allocation11] sm:$0xf]
    %v1884 = vld [vmem:[#allocation11 + $0x4] sm:$0xf]
    %v1885 = vld [vmem:[#allocation11 + $0x8] sm:$0xf]
    %v1886 = vld [vmem:[#allocation11 + $0xc] sm:$0xf]
    %v1887 = vld [vmem:[#allocation11 + $0x10] sm:$0xf]
    %v1888 = vld [vmem:[#allocation11 + $0x14] sm:$0xf]
    %v1889 = vld [vmem:[#allocation11 + $0x18] sm:$0xf]
    %v1890 = vld [vmem:[#allocation11 + $0x1c] sm:$0xf]
    %v1891 = vld [vmem:[#allocation11 + $0x20] sm:$0xf]
    %v1892 = vld [vmem:[#allocation11 + $0x24] sm:$0xf]
    %v1893 = vld [vmem:[#allocation11 + $0x28] sm:$0xf]
    %v1894 = vld [vmem:[#allocation11 + $0x2c] sm:$0xf]
    %v1895 = vld [vmem:[#allocation11 + $0x30] sm:$0xf]
    %v1896 = vld [vmem:[#allocation11 + $0x34] sm:$0xf]
    %v1897 = vld [vmem:[#allocation11 + $0x38] sm:$0xf]
    %v1898 = vld [vmem:[#allocation11 + $0x3c] sm:$0xf]
    %v1899 = vld [vmem:[#allocation14 + $0x4] ss:$0 sm:$0xff]
    %v1916 = vunpack.c.l.b16 %v1883
    %v1917 = vunpack.c.l.b16 %v1884
    %v1918 = vunpack.c.l.b16 %v1885
    %v1919 = vunpack.c.l.b16 %v1886
    %v1920 = vunpack.c.l.b16 %v1887
    %v1921 = vunpack.c.l.b16 %v1888
    %v1922 = vunpack.c.l.b16 %v1889
    %v1923 = vunpack.c.l.b16 %v1890
    %v1924 = vunpack.c.l.b16 %v1891
    %v1925 = vunpack.c.l.b16 %v1892
    %v1926 = vunpack.c.l.b16 %v1893
    %v1927 = vunpack.c.l.b16 %v1894
    %v1928 = vunpack.c.l.b16 %v1895
    %v1929 = vunpack.c.l.b16 %v1896
    %v1930 = vunpack.c.l.b16 %v1897
    %v1931 = vunpack.c.l.b16 %v1898
    %v1932 = vpack.c.b16 %v1917, %v1916
    %v1933 = vpack.c.b16 %v1919, %v1918
    %v1934 = vpack.c.b16 %v1921, %v1920
    %v1935 = vpack.c.b16 %v1923, %v1922
    %v1936 = vpack.c.b16 %v1925, %v1924
    %v1937 = vpack.c.b16 %v1927, %v1926
    %v1938 = vpack.c.b16 %v1929, %v1928
    %v1939 = vpack.c.b16 %v1931, %v1930
    %1948 = vmatprep.subr.bf16.mxu0 0
    %1949 = vmatpush1.bf16.msra.mxu0 %v1932
    %1950 = vmatprep.subr.bf16.mxu0 0
    %1951 = vmatpush1.bf16.msra.mxu0 %v1933
    %1952 = vmatprep.subr.bf16.mxu0 0
    %1953 = vmatpush1.bf16.msra.mxu0 %v1934
    %1954 = vmatprep.subr.bf16.mxu0 0
    %1955 = vmatpush1.bf16.msra.mxu0 %v1935
    %1956 = vmatprep.subr.bf16.mxu0 0
    %1957 = vmatpush1.bf16.msra.mxu0 %v1936
    %1958 = vmatprep.subr.bf16.mxu0 0
    %1959 = vmatpush1.bf16.msra.mxu0 %v1937
    %1960 = vmatprep.subr.bf16.mxu0 0
    %1961 = vmatpush1.bf16.msra.mxu0 %v1938
    %1962 = vmatprep.subr.bf16.mxu0 0
    %1963 = vmatpush1.bf16.msra.mxu0 %v1939
    %1964 = vmatprep.subr.bf16.mxu0 0
    %1965 = vmatpush1.bf16.msra.mxu0 0
    %1966 = vmatprep.subr.bf16.mxu0 0
    %1967 = vmatpush1.bf16.msra.mxu0 0
    %1968 = vmatprep.subr.bf16.mxu0 0
    %1969 = vmatpush1.bf16.msra.mxu0 0
    %1970 = vmatprep.subr.bf16.mxu0 0
    %1971 = vmatpush1.bf16.msra.mxu0 0
    %1972 = vmatprep.subr.bf16.mxu0 0
    %1973 = vmatpush1.bf16.msra.mxu0 0
    %1974 = vmatprep.subr.bf16.mxu0 0
    %1975 = vmatpush1.bf16.msra.mxu0 0
    %1976 = vmatprep.subr.bf16.mxu0 0
    %1977 = vmatpush1.bf16.msra.mxu0 0
    %1978 = vmatprep.subr.bf16.mxu0 0
    %1979 = vmatpush1.bf16.msra.mxu0 0
    %1980 = vmatprep.mubr.bf16.mxu0 0
    %1981 = vmatmul.mubr.bf16.gmra.mrb[0].mxu0 %v1882
    %v1982 = vpop.f32.mrb[0].mxu0
    %v1983 = vadd.f32 %v1899, %v1982
    %v1984 = vpop.f32.mrb[0].mxu0
    %v1985 = vpop.f32.mrb[0].mxu0
    %v1986 = vpop.f32.mrb[0].mxu0
    %1987 = vdwg.mxu0
    %vm1988 = vcmp.gt.f32.partialorder %v1983, 0.0
    %v1989 = vmul.f32 %v1983, 0.01
    %v1990 = vsel %vm1988, %v1983, %v1989
    %v1991 = vpack.c.bf16 %v1990, %v1990
    %v1992 = vld [vmem:[#allocation13] sm:$0xf]
    %v1993 = vld [vmem:[#allocation13 + $0x4] sm:$0xf]
    %v1994 = vld [vmem:[#allocation13 + $0x8] sm:$0xf]
    %v1995 = vld [vmem:[#allocation13 + $0xc] sm:$0xf]
    %v1996 = vld [vmem:[#allocation13 + $0x10] sm:$0xf]
    %v1997 = vld [vmem:[#allocation13 + $0x14] sm:$0xf]
    %v1998 = vld [vmem:[#allocation13 + $0x18] sm:$0xf]
    %v1999 = vld [vmem:[#allocation13 + $0x1c] sm:$0xf]
    %v2000 = vld [vmem:[#allocation13 + $0x20] sm:$0xf]
    %v2001 = vld [vmem:[#allocation13 + $0x24] sm:$0xf]
    %v2002 = vld [vmem:[#allocation13 + $0x28] sm:$0xf]
    %v2003 = vld [vmem:[#allocation13 + $0x2c] sm:$0xf]
    %v2004 = vld [vmem:[#allocation13 + $0x30] sm:$0xf]
    %v2005 = vld [vmem:[#allocation13 + $0x34] sm:$0xf]
    %v2006 = vld [vmem:[#allocation13 + $0x38] sm:$0xf]
    %v2007 = vld [vmem:[#allocation13 + $0x3c] sm:$0xf]
    %v2008 = vld [vmem:[#allocation14 + $0x5] ss:$0 sm:$0xff]
    %v2025 = vunpack.c.l.b16 %v1992
    %v2026 = vunpack.c.l.b16 %v1993
    %v2027 = vunpack.c.l.b16 %v1994
    %v2028 = vunpack.c.l.b16 %v1995
    %v2029 = vunpack.c.l.b16 %v1996
    %v2030 = vunpack.c.l.b16 %v1997
    %v2031 = vunpack.c.l.b16 %v1998
    %v2032 = vunpack.c.l.b16 %v1999
    %v2033 = vunpack.c.l.b16 %v2000
    %v2034 = vunpack.c.l.b16 %v2001
    %v2035 = vunpack.c.l.b16 %v2002
    %v2036 = vunpack.c.l.b16 %v2003
    %v2037 = vunpack.c.l.b16 %v2004
    %v2038 = vunpack.c.l.b16 %v2005
    %v2039 = vunpack.c.l.b16 %v2006
    %v2040 = vunpack.c.l.b16 %v2007
    %v2041 = vpack.c.b16 %v2026, %v2025
    %v2042 = vpack.c.b16 %v2028, %v2027
    %v2043 = vpack.c.b16 %v2030, %v2029
    %v2044 = vpack.c.b16 %v2032, %v2031
    %v2045 = vpack.c.b16 %v2034, %v2033
    %v2046 = vpack.c.b16 %v2036, %v2035
    %v2047 = vpack.c.b16 %v2038, %v2037
    %v2048 = vpack.c.b16 %v2040, %v2039
    %2057 = vmatprep.subr.bf16.mxu0 0
    %2058 = vmatpush1.bf16.msra.mxu0 %v2041
    %2059 = vmatprep.subr.bf16.mxu0 0
    %2060 = vmatpush1.bf16.msra.mxu0 %v2042
    %2061 = vmatprep.subr.bf16.mxu0 0
    %2062 = vmatpush1.bf16.msra.mxu0 %v2043
    %2063 = vmatprep.subr.bf16.mxu0 0
    %2064 = vmatpush1.bf16.msra.mxu0 %v2044
    %2065 = vmatprep.subr.bf16.mxu0 0
    %2066 = vmatpush1.bf16.msra.mxu0 %v2045
    %2067 = vmatprep.subr.bf16.mxu0 0
    %2068 = vmatpush1.bf16.msra.mxu0 %v2046
    %2069 = vmatprep.subr.bf16.mxu0 0
    %2070 = vmatpush1.bf16.msra.mxu0 %v2047
    %2071 = vmatprep.subr.bf16.mxu0 0
    %2072 = vmatpush1.bf16.msra.mxu0 %v2048
    %2073 = vmatprep.subr.bf16.mxu0 0
    %2074 = vmatpush1.bf16.msra.mxu0 0
    %2075 = vmatprep.subr.bf16.mxu0 0
    %2076 = vmatpush1.bf16.msra.mxu0 0
    %2077 = vmatprep.subr.bf16.mxu0 0
    %2078 = vmatpush1.bf16.msra.mxu0 0
    %2079 = vmatprep.subr.bf16.mxu0 0
    %2080 = vmatpush1.bf16.msra.mxu0 0
    %2081 = vmatprep.subr.bf16.mxu0 0
    %2082 = vmatpush1.bf16.msra.mxu0 0
    %2083 = vmatprep.subr.bf16.mxu0 0
    %2084 = vmatpush1.bf16.msra.mxu0 0
    %2085 = vmatprep.subr.bf16.mxu0 0
    %2086 = vmatpush1.bf16.msra.mxu0 0
    %2087 = vmatprep.subr.bf16.mxu0 0
    %2088 = vmatpush1.bf16.msra.mxu0 0
    %2089 = vmatprep.mubr.bf16.mxu0 0
    %2090 = vmatmul.mubr.bf16.gmra.mrb[0].mxu0 %v1991
    %v2091 = vpop.f32.mrb[0].mxu0
    %v2092 = vadd.f32 %v2008, %v2091
    %v2093 = vpop.f32.mrb[0].mxu0
    %v2094 = vpop.f32.mrb[0].mxu0
    %v2095 = vpop.f32.mrb[0].mxu0
    %2096 = vdwg.mxu0
    %vm2097 = vcmp.gt.f32.partialorder %v2092, 0.0
    %v2098 = vmul.f32 %v2092, 0.01
    %v2099 = vsel %vm2097, %v2092, %v2098
    %2100 = vst [vmem:[#allocation16] sm:$0xff] %v2099
    // Predicated region
    $region66: #{tpu_custom_call.1} parent=1 // pred_check
      _
    $region67: #{tpu_custom_call.1} parent=1 // pred_check_branch
      %2102 = sbr.rel (0) target = $region69
    $region68: #{tpu_custom_call.1} parent=1 // pred_region
      %s2104 = ssub.s32 128, 128
      %2105 = vsyncadd [#allocation4], %s2104
      %s2107 = sshll.u32 [#allocation16], 4
      %s2108 = int_to_ptr.vmem [resolvable:$true] %s2107
      %2110 = dma.vmem_to_hbm [thread:$0]  %s2108, 128, %s8, [#allocation4]
    $region69: #{tpu_custom_call.1} parent=1 // pred_fallthru
      _
    // Predicated region
    $region70: #{tpu_custom_call.1} parent=1 // pred_check
      _
    $region71: #{tpu_custom_call.1} parent=1 // pred_check_branch
      %2112 = sbr.rel (0) target = $region73
    $region72: #{tpu_custom_call.1} parent=1 // pred_region
      %2113 = dma.done [#allocation4], 128
    $region73: #{tpu_custom_call.1} parent=1 // pred_fallthru
      _
    %2114 = vsyncpa [#allocation3], 1
    %2115 = vsyncpa [#allocation6], 1
    %2116 = vsyncpa [#allocation9], 1
    %2117 = vsyncpa [#allocation12], 1
    %2118 = vsyncpa [#allocation15], 1
    %2119 = vsyncpa [#allocation4], 1

</llo_original>
